<compile_context>
chip_gen: v6e
topology: v6e:2x2x1
jax: 0.10.0
libtpu: 0.0.40
codegen_flags: <defaults>
</compile_context>

<pallas_src>
import numpy as np
import jax
import jax.numpy as jnp
from jax.experimental import pallas as pl
from jax.experimental.pallas import tpu as pltpu


def best_group_divisor(c, gmax=8):
    for g in range(min(gmax, c), 0, -1):
        if c % g == 0:
            return g
    return 1


def _round_up(x, m):
    return (x + m - 1) // m * m


def _group_avg_matrix(c, g, hw, c_pad):
    # m @ per_channel_sum  ->  per-channel broadcast of the group mean (pad rows/cols 0).
    cpg = c // g
    idx = np.arange(c) // cpg
    m = np.zeros((c_pad, c_pad), np.float32)
    m[:c, :c] = (idx[:, None] == idx[None, :]).astype(np.float32) / float(cpg * hw)
    return jnp.asarray(m)


def _conv_tap_masks(h, w):
    # mask[k, p] = 1 iff conv tap k (k = ky*3 + kx) reads an in-image pixel at flattened
    # output position p (padding=1 zero padding otherwise).
    p = np.arange(h * w)
    row, col = p // w, p % w
    m = np.zeros((9, h * w), np.float32)
    for k in range(9):
        ky, kx = k // 3, k % 3
        valid = ((row + ky - 1 >= 0) & (row + ky - 1 < h) &
                 (col + kx - 1 >= 0) & (col + kx - 1 < w))
        m[k] = valid.astype(np.float32)
    return jnp.asarray(m)


# Columns of the consolidated per-channel vector operand.
_N1G, _N1B, _N2G, _N2B, _C1B, _C2B, _SKB = range(7)


# ----------------------------- Pallas kernel --------------------------------
def _make_kernel(H, W, cin_p, cout_p, b_tile, has_skip_conv):
    HW = H * W
    eps = 1e-5

    def kernel(*refs):
        if has_skip_conv:
            (x_ref, film_ref, vec_ref, gm1_ref, gm2_ref,
             w1_ref, w2_ref, mask_ref, wsk_ref, o_ref) = refs
        else:
            (x_ref, film_ref, vec_ref, gm1_ref, gm2_ref,
             w1_ref, w2_ref, mask_ref, o_ref) = refs

        vecs = vec_ref[...]                                           # (c_vec, 7) f32
        n1_g, n1_b = vecs[:cin_p, _N1G:_N1G + 1], vecs[:cin_p, _N1B:_N1B + 1]
        n2_g, n2_b = vecs[:cout_p, _N2G:_N2G + 1], vecs[:cout_p, _N2B:_N2B + 1]
        c1_b, c2_b = vecs[:cout_p, _C1B:_C1B + 1], vecs[:cout_p, _C2B:_C2B + 1]
        # Boundary masks loaded once per grid step, reused by both convs/images.
        mask_rows = [mask_ref[pl.ds(k, 1), :] for k in range(9)]      # each (1, HW)

        def group_norm_silu(v, gm_ref, gamma, beta):
            # v: (C, HW) f32.  Centered two-pass statistics in f32; gamma folded into
            # the normalization scale (one fewer full (C,HW) multiply per GroupNorm).
            s1 = jnp.sum(v, axis=1, keepdims=True)                            # (C, 1)
            mu = jnp.dot(gm_ref[...], s1, preferred_element_type=jnp.float32)
            d = v - mu
            s2 = jnp.sum(d * d, axis=1, keepdims=True)
            var = jnp.dot(gm_ref[...], s2, preferred_element_type=jnp.float32)
            scale = gamma * jax.lax.rsqrt(var + eps)                          # (C, 1)
            xn = d * scale + beta
            return xn * jax.nn.sigmoid(xn)                                    # SiLU

        def im2col(v):
            # v: (c, HW) f32 with c a multiple of 8 -> register-resident (9c, HW) patch
            # built from 9 XLU lane rolls + boundary masks; sublane-aligned concat.
            taps = []
            for k in range(9):
                ky, kx = k // 3, k % 3
                off = (ky - 1) * W + (kx - 1)            # flat spatial offset of tap k
                if off == 0:
                    tap = v                               # center tap: no shift/mask
                else:
                    tap = pltpu.roll(v, (-off) % HW, axis=1)   # tap[p] = v[p + off]
                    tap = tap * mask_rows[k]                   # zero out-of-image taps
                taps.append(tap)
            return jnp.concatenate(taps, axis=0)               # (9c, HW)

        def conv3x3(vs, w_ref, bias):
            # One bf16 MXU matmul over the lane-concatenated per-image patches:
            # (cout, 9c) @ (9c, b_tile*HW), f32 accumulation.
            patches = [im2col(v) for v in vs]
            patch = patches[0] if len(patches) == 1 else jnp.concatenate(patches, axis=1)
            out = jnp.dot(w_ref[...], patch.astype(jnp.bfloat16),
                          preferred_element_type=jnp.float32)
            return [out[:, i * HW:(i + 1) * HW] + bias for i in range(len(vs))]

        xs = [x_ref[i].astype(jnp.float32) for i in range(b_tile)]    # (cin_p, HW)

        hs = [group_norm_silu(x, gm1_ref, n1_g, n1_b) for x in xs]
        hs = conv3x3(hs, w1_ref, c1_b)                                # (cout_p, HW)
        films = [film_ref[i] for i in range(b_tile)]                  # (cout_p, 2)
        hs = [h * (1.0 + f[:, 0:1]) + f[:, 1:2] for h, f in zip(hs, films)]   # FiLM
        hs = [group_norm_silu(h, gm2_ref, n2_g, n2_b) for h in hs]
        hs = conv3x3(hs, w2_ref, c2_b)

        if has_skip_conv:
            sk_b = vecs[:cout_p, _SKB:_SKB + 1]
            xcat = xs[0] if b_tile == 1 else jnp.concatenate(xs, axis=1)
            sk = jnp.dot(wsk_ref[...], xcat.astype(jnp.bfloat16),
                         preferred_element_type=jnp.float32)          # (cout_p, b*HW)
            sks = [sk[:, i * HW:(i + 1) * HW] + sk_b for i in range(b_tile)]
        else:
            sks = xs                                       # nn.Identity(): no matmul

        for i in range(b_tile):
            o_ref[i] = (hs[i] + sks[i]).astype(o_ref.dtype)

    return kernel


# ------------------------------- wrapper -------------------------------------
def _pick_b_tile(n, hw, c_p, target_lanes=2048, vmem_budget=8 << 20):
    # Batch images per grid step until the conv RHS is comfortably lane-wide while
    # keeping the (double-buffered) in/out blocks small vs. default scoped VMEM.
    per_img = 4 * c_p * hw * 4                      # in+out blocks, 2x buffered, f32
    bt = min(n, max(1, target_lanes // hw), max(1, vmem_budget // per_img))
    bt = max(1, bt)
    while n % bt:
        bt -= 1
    return bt


def residual_block_pallas(x_nchw, emb, params):
    N, Cin, H, W = x_nchw.shape
    Cout = params["c1_w"].shape[0]
    HW = H * W
    has_skip_conv = params["skip_w"] is not None
    if not has_skip_conv:
        assert Cin == Cout, "nn.Identity() skip requires in_c == out_c"

    g1 = best_group_divisor(Cin)
    g2 = best_group_divisor(Cout)
    cin_p, cout_p = _round_up(Cin, 8), _round_up(Cout, 8)
    c_vec = max(cin_p, cout_p)
    b_tile = _pick_b_tile(N, HW, max(cin_p, cout_p))

    # NCHW -> (N, C, HW): pure reshape, native dtype; channels padded to a multiple of
    # 8 so every sublane access / concat inside the kernel is tile-aligned.
    x = x_nchw.reshape(N, Cin, HW)
    if cin_p != Cin:
        x = jnp.pad(x, ((0, 0), (0, cin_p - Cin), (0, 0)))

    # FiLM linear hoisted out of the kernel; (scale, shift) packed per channel.
    ss = (emb.astype(jnp.float32) @ params["emb_w"].T.astype(jnp.float32)
          + params["emb_b"].astype(jnp.float32))                     # (N, 2*Cout)
    film = jnp.stack([ss[:, :Cout], ss[:, Cout:]], axis=-1)          # (N, Cout, 2)
    if cout_p != Cout:
        film = jnp.pad(film, ((0, 0), (0, cout_p - Cout), (0, 0)))

    # Conv weights -> (cout_p, 9*ci_p) matching im2col row order (tap-major,
    # channel-minor); padded channels get zero columns/rows; bf16 for the MXU.
    def conv_w(w, ci_p):
        co, ci = w.shape[0], w.shape[1]
        w = jnp.pad(w, ((0, cout_p - co), (0, ci_p - ci), (0, 0), (0, 0)))
        return jnp.transpose(w, (0, 2, 3, 1)).reshape(cout_p, 9 * ci_p).astype(jnp.bfloat16)

    w1 = conv_w(params["c1_w"], cin_p)
    w2 = conv_w(params["c2_w"], cout_p)

    # All tiny per-channel vectors consolidated into a single (c_vec, 7) operand.
    def _col(v, c_real):
        v = jnp.asarray(v, jnp.float32).reshape(-1)
        return jnp.pad(v, (0, c_vec - c_real))

    cols = [None] * 7
    cols[_N1G] = _col(params["n1_g"], Cin)
    cols[_N1B] = _col(params["n1_b"], Cin)
    cols[_N2G] = _col(params["n2_g"], Cout)
    cols[_N2B] = _col(params["n2_b"], Cout)
    cols[_C1B] = _col(params["c1_b"], Cout)
    cols[_C2B] = _col(params["c2_b"], Cout)
    cols[_SKB] = (_col(params["skip_b"], Cout) if has_skip_conv
                  else jnp.zeros((c_vec,), jnp.float32))
    vecs = jnp.stack(cols, axis=1)                                   # (c_vec, 7)

    args = [x, film, vecs,
            _group_avg_matrix(Cin, g1, HW, cin_p),
            _group_avg_matrix(Cout, g2, HW, cout_p),
            w1, w2, _conv_tap_masks(H, W)]

    def _bcast(shape):
        return pl.BlockSpec(shape, lambda n: tuple(0 for _ in shape))

    in_specs = [
        pl.BlockSpec((b_tile, cin_p, HW), lambda n: (n, 0, 0)),
        pl.BlockSpec((b_tile, cout_p, 2), lambda n: (n, 0, 0)),
        _bcast((c_vec, 7)),
        _bcast((cin_p, cin_p)), _bcast((cout_p, cout_p)),
        _bcast((cout_p, 9 * cin_p)), _bcast((cout_p, 9 * cout_p)),
        _bcast((9, HW)),
    ]
    if has_skip_conv:
        wsk = jnp.pad(params["skip_w"][:, :, 0, 0],
                      ((0, cout_p - Cout), (0, cin_p - Cin))).astype(jnp.bfloat16)
        args.append(wsk)
        in_specs.append(_bcast((cout_p, cin_p)))

    kernel = _make_kernel(H, W, cin_p, cout_p, b_tile, has_skip_conv)

    out = pl.pallas_call(
        kernel,
        out_shape=jax.ShapeDtypeStruct((N, cout_p, HW), x_nchw.dtype),
        grid_spec=pltpu.PrefetchScalarGridSpec(
            num_scalar_prefetch=0,
            grid=(N // b_tile,),
            in_specs=in_specs,
            out_specs=pl.BlockSpec((b_tile, cout_p, HW), lambda n: (n, 0, 0)),
        ),
        compiler_params=pltpu.CompilerParams(
            dimension_semantics=("parallel",),     # batch steps are independent
        ),
    )(*args)

    return out[:, :Cout, :].reshape(N, Cout, H, W)


# --------------------------- plain-JAX reference ------------------------------
def _group_norm_ref(x, g, gamma, beta, eps=1e-5):
    N, C, H, W = x.shape
    xg = x.reshape(N, g, (C // g) * H * W)
    mu = xg.mean(axis=-1, keepdims=True)
    var = xg.var(axis=-1, keepdims=True)
    xn = ((xg - mu) / jnp.sqrt(var + eps)).reshape(N, C, H, W)
    return xn * gamma[None, :, None, None] + beta[None, :, None, None]


def _conv_ref(x, w, b, pad):
    y = jax.lax.conv_general_dilated(x, w, (1, 1), ((pad, pad), (pad, pad)),
                                     dimension_numbers=("NCHW", "OIHW", "NCHW"))
    return y + b[None, :, None, None]


def residual_block_ref(x, emb, params):
    Cin = x.shape[1]
    Cout = params["c1_w"].shape[0]
    g1, g2 = best_group_divisor(Cin), best_group_divisor(Cout)
    h = _conv_ref(jax.nn.silu(_group_norm_ref(x, g1, params["n1_g"], params["n1_b"])),
                  params["c1_w"], params["c1_b"], 1)
    ss = emb @ params["emb_w"].T + params["emb_b"]
    scale, shift = ss[:, :Cout], ss[:, Cout:]
    h = h * (1.0 + scale[:, :, None, None]) + shift[:, :, None, None]
    h = _conv_ref(jax.nn.silu(_group_norm_ref(h, g2, params["n2_g"], params["n2_b"])),
                  params["c2_w"], params["c2_b"], 1)
    if params["skip_w"] is None:
        skip = x
    else:
        skip = _conv_ref(x, params["skip_w"], params["skip_b"], 0)
    return h + skip


def _make_params(key, cin, cout, e, identity_skip):
    ks = jax.random.split(key, 12)
    return {
        "n1_g": 1.0 + 0.1 * jax.random.normal(ks[0], (cin,), jnp.float32),
        "n1_b": 0.1 * jax.random.normal(ks[1], (cin,), jnp.float32),
        "n2_g": 1.0 + 0.1 * jax.random.normal(ks[2], (cout,), jnp.float32),
        "n2_b": 0.1 * jax.random.normal(ks[3], (cout,), jnp.float32),
        "c1_w": 0.2 * jax.random.normal(ks[4], (cout, cin, 3, 3), jnp.float32),
        "c1_b": 0.1 * jax.random.normal(ks[5], (cout,), jnp.float32),
        "c2_w": 0.2 * jax.random.normal(ks[6], (cout, cout, 3, 3), jnp.float32),
        "c2_b": 0.1 * jax.random.normal(ks[7], (cout,), jnp.float32),
        "emb_w": 0.2 * jax.random.normal(ks[8], (2 * cout, e), jnp.float32),
        "emb_b": 0.1 * jax.random.normal(ks[9], (2 * cout,), jnp.float32),
        "skip_w": None if identity_skip
        else 0.2 * jax.random.normal(ks[10], (cout, cin, 1, 1), jnp.float32),
        "skip_b": None if identity_skip
        else 0.1 * jax.random.normal(ks[11], (cout,), jnp.float32),
    }


# ---------------------------------- main --------------------------------------
if __name__ == "__main__":
    key = jax.random.PRNGKey(0)
    k_p1, k_p2, k_x1, k_e1, k_x2, k_e2 = jax.random.split(key, 6)

    # Case 1: in_c != out_c  ->  skip is a 1x1 conv (bf16 skip matmul path,
    # exercises channel padding 4 -> 8).
    N, Cin, Cout, E, H, W = 2, 4, 8, 16, 16, 16
    params = _make_params(k_p1, Cin, Cout, E, identity_skip=False)
    x = jax.random.normal(k_x1, (N, Cin, H, W), jnp.float32)
    emb = jax.random.normal(k_e1, (N, E), jnp.float32)

    out = jax.block_until_ready(residual_block_pallas(x, emb, params))
    ref = jax.block_until_ready(residual_block_ref(x, emb, params))
    assert out.shape == (N, Cout, H, W), out.shape
    err1 = float(jnp.max(jnp.abs(out - ref)))
    assert err1 < 1e-1, f"skip-conv case: max abs error {err1}"  # bf16 MXU matmuls

    # Case 2: in_c == out_c  ->  nn.Identity() skip (no skip matmul in kernel).
    C2 = 8
    params2 = _make_params(k_p2, C2, C2, E, identity_skip=True)
    x2 = jax.random.normal(k_x2, (N, C2, H, W), jnp.float32)
    emb2 = jax.random.normal(k_e2, (N, E), jnp.float32)

    out2 = jax.block_until_ready(residual_block_pallas(x2, emb2, params2))
    ref2 = jax.block_until_ready(residual_block_ref(x2, emb2, params2))
    assert out2.shape == (N, C2, H, W), out2.shape
    err2 = float(jnp.max(jnp.abs(out2 - ref2)))
    assert err2 < 1e-1, f"identity-skip case: max abs error {err2}"

    print("KERNEL_OK")
</pallas_src>

<mosaic_0001>
module attributes {stable_mosaic.version = 11 : i64} {
  func.func @kernel(%arg0: i32, %arg1: memref<2x8x256xf32, #tpu.memory_space<vmem>>, %arg2: memref<2x8x2xf32, #tpu.memory_space<vmem>>, %arg3: memref<8x7xf32, #tpu.memory_space<vmem>>, %arg4: memref<8x8xf32, #tpu.memory_space<vmem>>, %arg5: memref<8x8xf32, #tpu.memory_space<vmem>>, %arg6: memref<8x72xbf16, #tpu.memory_space<vmem>>, %arg7: memref<8x72xbf16, #tpu.memory_space<vmem>>, %arg8: memref<9x256xf32, #tpu.memory_space<vmem>>, %arg9: memref<8x8xbf16, #tpu.memory_space<vmem>>, %arg10: memref<2x8x256xf32, #tpu.memory_space<vmem>>) attributes {dimension_semantics = [#tpu.dimension_semantics<parallel>], iteration_bounds = array<i64: 1>, scalar_prefetch = 0 : i64, scratch_operands = 0 : i64, tpu.core_type = #tpu.core_type<tc>, window_params = [{transform_indices = @transform_0, window_bounds = array<i64: 2, 8, 256>}, {transform_indices = @transform_1, window_bounds = array<i64: 2, 8, 2>}, {pipeline_mode = #tpu.pipeline_mode<synchronous>, transform_indices = @transform_2, window_bounds = array<i64: 8, 7>}, {pipeline_mode = #tpu.pipeline_mode<synchronous>, transform_indices = @transform_3, window_bounds = array<i64: 8, 8>}, {pipeline_mode = #tpu.pipeline_mode<synchronous>, transform_indices = @transform_4, window_bounds = array<i64: 8, 8>}, {pipeline_mode = #tpu.pipeline_mode<synchronous>, transform_indices = @transform_5, window_bounds = array<i64: 8, 72>}, {pipeline_mode = #tpu.pipeline_mode<synchronous>, transform_indices = @transform_6, window_bounds = array<i64: 8, 72>}, {pipeline_mode = #tpu.pipeline_mode<synchronous>, transform_indices = @transform_7, window_bounds = array<i64: 9, 256>}, {pipeline_mode = #tpu.pipeline_mode<synchronous>, transform_indices = @transform_8, window_bounds = array<i64: 8, 8>}, {transform_indices = @transform_9, window_bounds = array<i64: 2, 8, 256>}]} {
    %c0 = arith.constant 0 : index
    %c0_0 = arith.constant 0 : index
    %0 = vector.load %arg3[%c0, %c0_0] : memref<8x7xf32, #tpu.memory_space<vmem>>, vector<8x7xf32>
    %1 = vector.extract_strided_slice %0 {offsets = [0, 0], sizes = [8, 1], strides = [1, 1]} : vector<8x7xf32> to vector<8x1xf32>
    %2 = vector.extract_strided_slice %0 {offsets = [0, 1], sizes = [8, 1], strides = [1, 1]} : vector<8x7xf32> to vector<8x1xf32>
    %3 = vector.extract_strided_slice %0 {offsets = [0, 2], sizes = [8, 1], strides = [1, 1]} : vector<8x7xf32> to vector<8x1xf32>
    %4 = vector.extract_strided_slice %0 {offsets = [0, 3], sizes = [8, 1], strides = [1, 1]} : vector<8x7xf32> to vector<8x1xf32>
    %5 = vector.extract_strided_slice %0 {offsets = [0, 4], sizes = [8, 1], strides = [1, 1]} : vector<8x7xf32> to vector<8x1xf32>
    %6 = vector.extract_strided_slice %0 {offsets = [0, 5], sizes = [8, 1], strides = [1, 1]} : vector<8x7xf32> to vector<8x1xf32>
    %c0_1 = arith.constant 0 : index
    %c0_2 = arith.constant 0 : index
    %7 = vector.load %arg8[%c0_1, %c0_2] : memref<9x256xf32, #tpu.memory_space<vmem>>, vector<1x256xf32>
    %c1 = arith.constant 1 : index
    %c0_3 = arith.constant 0 : index
    %8 = vector.load %arg8[%c1, %c0_3] : memref<9x256xf32, #tpu.memory_space<vmem>>, vector<1x256xf32>
    %c2 = arith.constant 2 : index
    %c0_4 = arith.constant 0 : index
    %9 = vector.load %arg8[%c2, %c0_4] : memref<9x256xf32, #tpu.memory_space<vmem>>, vector<1x256xf32>
    %c3 = arith.constant 3 : index
    %c0_5 = arith.constant 0 : index
    %10 = vector.load %arg8[%c3, %c0_5] : memref<9x256xf32, #tpu.memory_space<vmem>>, vector<1x256xf32>
    %c5 = arith.constant 5 : index
    %c0_6 = arith.constant 0 : index
    %11 = vector.load %arg8[%c5, %c0_6] : memref<9x256xf32, #tpu.memory_space<vmem>>, vector<1x256xf32>
    %c6 = arith.constant 6 : index
    %c0_7 = arith.constant 0 : index
    %12 = vector.load %arg8[%c6, %c0_7] : memref<9x256xf32, #tpu.memory_space<vmem>>, vector<1x256xf32>
    %c7 = arith.constant 7 : index
    %c0_8 = arith.constant 0 : index
    %13 = vector.load %arg8[%c7, %c0_8] : memref<9x256xf32, #tpu.memory_space<vmem>>, vector<1x256xf32>
    %c8 = arith.constant 8 : index
    %c0_9 = arith.constant 0 : index
    %14 = vector.load %arg8[%c8, %c0_9] : memref<9x256xf32, #tpu.memory_space<vmem>>, vector<1x256xf32>
    %c0_10 = arith.constant 0 : index
    %c0_11 = arith.constant 0 : index
    %c0_12 = arith.constant 0 : index
    %15 = vector.load %arg1[%c0_10, %c0_11, %c0_12] : memref<2x8x256xf32, #tpu.memory_space<vmem>>, vector<1x8x256xf32>
    %16 = vector.shape_cast %15 : vector<1x8x256xf32> to vector<8x256xf32>
    %c1_13 = arith.constant 1 : index
    %c0_14 = arith.constant 0 : index
    %c0_15 = arith.constant 0 : index
    %17 = vector.load %arg1[%c1_13, %c0_14, %c0_15] : memref<2x8x256xf32, #tpu.memory_space<vmem>>, vector<1x8x256xf32>
    %18 = vector.shape_cast %17 : vector<1x8x256xf32> to vector<8x256xf32>
    %cst = arith.constant dense<0.000000e+00> : vector<8xf32>
    %19 = vector.multi_reduction <add>, %16, %cst [1] : vector<8x256xf32> to vector<8xf32>
    %20 = vector.shape_cast %19 : vector<8xf32> to vector<8x1xf32>
    %c0_16 = arith.constant 0 : index
    %c0_17 = arith.constant 0 : index
    %21 = vector.load %arg4[%c0_16, %c0_17] : memref<8x8xf32, #tpu.memory_space<vmem>>, vector<8x8xf32>
    %cst_18 = arith.constant dense<0.000000e+00> : vector<8x1xf32>
    %22 = tpu.matmul %21, %20, %cst_18 {dimension_numbers = #tpu.dot_dimension_numbers<[1], [0], [0], [1], [0, 0, 1, 1], [], []>} : vector<8x8xf32>, vector<8x1xf32>, vector<8x1xf32> -> vector<8x1xf32>
    %23 = vector.broadcast %22 : vector<8x1xf32> to vector<8x256xf32>
    %24 = arith.subf %16, %23 : vector<8x256xf32>
    %25 = arith.mulf %24, %24 : vector<8x256xf32>
    %cst_19 = arith.constant dense<0.000000e+00> : vector<8xf32>
    %26 = vector.multi_reduction <add>, %25, %cst_19 [1] : vector<8x256xf32> to vector<8xf32>
    %27 = vector.shape_cast %26 : vector<8xf32> to vector<8x1xf32>
    %c0_20 = arith.constant 0 : index
    %c0_21 = arith.constant 0 : index
    %28 = vector.load %arg4[%c0_20, %c0_21] : memref<8x8xf32, #tpu.memory_space<vmem>>, vector<8x8xf32>
    %cst_22 = arith.constant dense<0.000000e+00> : vector<8x1xf32>
    %29 = tpu.matmul %28, %27, %cst_22 {dimension_numbers = #tpu.dot_dimension_numbers<[1], [0], [0], [1], [0, 0, 1, 1], [], []>} : vector<8x8xf32>, vector<8x1xf32>, vector<8x1xf32> -> vector<8x1xf32>
    %cst_23 = arith.constant 9.99999974E-6 : f32
    %30 = vector.broadcast %cst_23 : f32 to vector<8x1xf32>
    %31 = arith.addf %29, %30 : vector<8x1xf32>
    %32 = math.rsqrt %31 : vector<8x1xf32>
    %33 = arith.mulf %1, %32 : vector<8x1xf32>
    %34 = vector.broadcast %33 : vector<8x1xf32> to vector<8x256xf32>
    %35 = arith.mulf %24, %34 : vector<8x256xf32>
    %36 = vector.broadcast %2 : vector<8x1xf32> to vector<8x256xf32>
    %37 = arith.addf %35, %36 : vector<8x256xf32>
    %38 = arith.negf %37 : vector<8x256xf32>
    %39 = math.exp %38 : vector<8x256xf32>
    %cst_24 = arith.constant 1.000000e+00 : f32
    %40 = vector.broadcast %cst_24 : f32 to vector<8x256xf32>
    %41 = arith.addf %40, %39 : vector<8x256xf32>
    %42 = arith.divf %40, %41 : vector<8x256xf32>
    %43 = arith.mulf %37, %42 : vector<8x256xf32>
    %cst_25 = arith.constant dense<0.000000e+00> : vector<8xf32>
    %44 = vector.multi_reduction <add>, %18, %cst_25 [1] : vector<8x256xf32> to vector<8xf32>
    %45 = vector.shape_cast %44 : vector<8xf32> to vector<8x1xf32>
    %c0_26 = arith.constant 0 : index
    %c0_27 = arith.constant 0 : index
    %46 = vector.load %arg4[%c0_26, %c0_27] : memref<8x8xf32, #tpu.memory_space<vmem>>, vector<8x8xf32>
    %cst_28 = arith.constant dense<0.000000e+00> : vector<8x1xf32>
    %47 = tpu.matmul %46, %45, %cst_28 {dimension_numbers = #tpu.dot_dimension_numbers<[1], [0], [0], [1], [0, 0, 1, 1], [], []>} : vector<8x8xf32>, vector<8x1xf32>, vector<8x1xf32> -> vector<8x1xf32>
    %48 = vector.broadcast %47 : vector<8x1xf32> to vector<8x256xf32>
    %49 = arith.subf %18, %48 : vector<8x256xf32>
    %50 = arith.mulf %49, %49 : vector<8x256xf32>
    %cst_29 = arith.constant dense<0.000000e+00> : vector<8xf32>
    %51 = vector.multi_reduction <add>, %50, %cst_29 [1] : vector<8x256xf32> to vector<8xf32>
    %52 = vector.shape_cast %51 : vector<8xf32> to vector<8x1xf32>
    %c0_30 = arith.constant 0 : index
    %c0_31 = arith.constant 0 : index
    %53 = vector.load %arg4[%c0_30, %c0_31] : memref<8x8xf32, #tpu.memory_space<vmem>>, vector<8x8xf32>
    %cst_32 = arith.constant dense<0.000000e+00> : vector<8x1xf32>
    %54 = tpu.matmul %53, %52, %cst_32 {dimension_numbers = #tpu.dot_dimension_numbers<[1], [0], [0], [1], [0, 0, 1, 1], [], []>} : vector<8x8xf32>, vector<8x1xf32>, vector<8x1xf32> -> vector<8x1xf32>
    %cst_33 = arith.constant 9.99999974E-6 : f32
    %55 = vector.broadcast %cst_33 : f32 to vector<8x1xf32>
    %56 = arith.addf %54, %55 : vector<8x1xf32>
    %57 = math.rsqrt %56 : vector<8x1xf32>
    %58 = arith.mulf %1, %57 : vector<8x1xf32>
    %59 = vector.broadcast %58 : vector<8x1xf32> to vector<8x256xf32>
    %60 = arith.mulf %49, %59 : vector<8x256xf32>
    %61 = vector.broadcast %2 : vector<8x1xf32> to vector<8x256xf32>
    %62 = arith.addf %60, %61 : vector<8x256xf32>
    %63 = arith.negf %62 : vector<8x256xf32>
    %64 = math.exp %63 : vector<8x256xf32>
    %cst_34 = arith.constant 1.000000e+00 : f32
    %65 = vector.broadcast %cst_34 : f32 to vector<8x256xf32>
    %66 = arith.addf %65, %64 : vector<8x256xf32>
    %67 = arith.divf %65, %66 : vector<8x256xf32>
    %68 = arith.mulf %62, %67 : vector<8x256xf32>
    %c17_i32 = arith.constant 17 : i32
    %69 = tpu.dynamic_rotate %43 by %c17_i32 dim 1 : vector<8x256xf32>, i32 -> vector<8x256xf32>
    %70 = vector.broadcast %7 : vector<1x256xf32> to vector<8x256xf32>
    %71 = arith.mulf %69, %70 : vector<8x256xf32>
    %c16_i32 = arith.constant 16 : i32
    %72 = tpu.dynamic_rotate %43 by %c16_i32 dim 1 : vector<8x256xf32>, i32 -> vector<8x256xf32>
    %73 = vector.broadcast %8 : vector<1x256xf32> to vector<8x256xf32>
    %74 = arith.mulf %72, %73 : vector<8x256xf32>
    %c15_i32 = arith.constant 15 : i32
    %75 = tpu.dynamic_rotate %43 by %c15_i32 dim 1 : vector<8x256xf32>, i32 -> vector<8x256xf32>
    %76 = vector.broadcast %9 : vector<1x256xf32> to vector<8x256xf32>
    %77 = arith.mulf %75, %76 : vector<8x256xf32>
    %c1_i32 = arith.constant 1 : i32
    %78 = tpu.dynamic_rotate %43 by %c1_i32 dim 1 : vector<8x256xf32>, i32 -> vector<8x256xf32>
    %79 = vector.broadcast %10 : vector<1x256xf32> to vector<8x256xf32>
    %80 = arith.mulf %78, %79 : vector<8x256xf32>
    %c255_i32 = arith.constant 255 : i32
    %81 = tpu.dynamic_rotate %43 by %c255_i32 dim 1 : vector<8x256xf32>, i32 -> vector<8x256xf32>
    %82 = vector.broadcast %11 : vector<1x256xf32> to vector<8x256xf32>
    %83 = arith.mulf %81, %82 : vector<8x256xf32>
    %c241_i32 = arith.constant 241 : i32
    %84 = tpu.dynamic_rotate %43 by %c241_i32 dim 1 : vector<8x256xf32>, i32 -> vector<8x256xf32>
    %85 = vector.broadcast %12 : vector<1x256xf32> to vector<8x256xf32>
    %86 = arith.mulf %84, %85 : vector<8x256xf32>
    %c240_i32 = arith.constant 240 : i32
    %87 = tpu.dynamic_rotate %43 by %c240_i32 dim 1 : vector<8x256xf32>, i32 -> vector<8x256xf32>
    %88 = vector.broadcast %13 : vector<1x256xf32> to vector<8x256xf32>
    %89 = arith.mulf %87, %88 : vector<8x256xf32>
    %c239_i32 = arith.constant 239 : i32
    %90 = tpu.dynamic_rotate %43 by %c239_i32 dim 1 : vector<8x256xf32>, i32 -> vector<8x256xf32>
    %91 = vector.broadcast %14 : vector<1x256xf32> to vector<8x256xf32>
    %92 = arith.mulf %90, %91 : vector<8x256xf32>
    %93 = tpu.concatenate %71, %74, %77, %80, %43, %83, %86, %89, %92 in 0 : vector<8x256xf32>, vector<8x256xf32>, vector<8x256xf32>, vector<8x256xf32>, vector<8x256xf32>, vector<8x256xf32>, vector<8x256xf32>, vector<8x256xf32>, vector<8x256xf32> -> vector<72x256xf32>
    %c17_i32_35 = arith.constant 17 : i32
    %94 = tpu.dynamic_rotate %68 by %c17_i32_35 dim 1 : vector<8x256xf32>, i32 -> vector<8x256xf32>
    %95 = vector.broadcast %7 : vector<1x256xf32> to vector<8x256xf32>
    %96 = arith.mulf %94, %95 : vector<8x256xf32>
    %c16_i32_36 = arith.constant 16 : i32
    %97 = tpu.dynamic_rotate %68 by %c16_i32_36 dim 1 : vector<8x256xf32>, i32 -> vector<8x256xf32>
    %98 = vector.broadcast %8 : vector<1x256xf32> to vector<8x256xf32>
    %99 = arith.mulf %97, %98 : vector<8x256xf32>
    %c15_i32_37 = arith.constant 15 : i32
    %100 = tpu.dynamic_rotate %68 by %c15_i32_37 dim 1 : vector<8x256xf32>, i32 -> vector<8x256xf32>
    %101 = vector.broadcast %9 : vector<1x256xf32> to vector<8x256xf32>
    %102 = arith.mulf %100, %101 : vector<8x256xf32>
    %c1_i32_38 = arith.constant 1 : i32
    %103 = tpu.dynamic_rotate %68 by %c1_i32_38 dim 1 : vector<8x256xf32>, i32 -> vector<8x256xf32>
    %104 = vector.broadcast %10 : vector<1x256xf32> to vector<8x256xf32>
    %105 = arith.mulf %103, %104 : vector<8x256xf32>
    %c255_i32_39 = arith.constant 255 : i32
    %106 = tpu.dynamic_rotate %68 by %c255_i32_39 dim 1 : vector<8x256xf32>, i32 -> vector<8x256xf32>
    %107 = vector.broadcast %11 : vector<1x256xf32> to vector<8x256xf32>
    %108 = arith.mulf %106, %107 : vector<8x256xf32>
    %c241_i32_40 = arith.constant 241 : i32
    %109 = tpu.dynamic_rotate %68 by %c241_i32_40 dim 1 : vector<8x256xf32>, i32 -> vector<8x256xf32>
    %110 = vector.broadcast %12 : vector<1x256xf32> to vector<8x256xf32>
    %111 = arith.mulf %109, %110 : vector<8x256xf32>
    %c240_i32_41 = arith.constant 240 : i32
    %112 = tpu.dynamic_rotate %68 by %c240_i32_41 dim 1 : vector<8x256xf32>, i32 -> vector<8x256xf32>
    %113 = vector.broadcast %13 : vector<1x256xf32> to vector<8x256xf32>
    %114 = arith.mulf %112, %113 : vector<8x256xf32>
    %c239_i32_42 = arith.constant 239 : i32
    %115 = tpu.dynamic_rotate %68 by %c239_i32_42 dim 1 : vector<8x256xf32>, i32 -> vector<8x256xf32>
    %116 = vector.broadcast %14 : vector<1x256xf32> to vector<8x256xf32>
    %117 = arith.mulf %115, %116 : vector<8x256xf32>
    %118 = tpu.concatenate %96, %99, %102, %105, %68, %108, %111, %114, %117 in 0 : vector<8x256xf32>, vector<8x256xf32>, vector<8x256xf32>, vector<8x256xf32>, vector<8x256xf32>, vector<8x256xf32>, vector<8x256xf32>, vector<8x256xf32>, vector<8x256xf32> -> vector<72x256xf32>
    %119 = tpu.concatenate %93, %118 in 1 : vector<72x256xf32>, vector<72x256xf32> -> vector<72x512xf32>
    %c0_43 = arith.constant 0 : index
    %c0_44 = arith.constant 0 : index
    %120 = vector.load %arg6[%c0_43, %c0_44] : memref<8x72xbf16, #tpu.memory_space<vmem>>, vector<8x72xbf16>
    %121 = arith.truncf %119 : vector<72x512xf32> to vector<72x512xbf16>
    %cst_45 = arith.constant dense<0.000000e+00> : vector<8x512xf32>
    %122 = tpu.matmul %120, %121, %cst_45 {dimension_numbers = #tpu.dot_dimension_numbers<[1], [0], [0], [1], [0, 0, 1, 1], [], []>} : vector<8x72xbf16>, vector<72x512xbf16>, vector<8x512xf32> -> vector<8x512xf32>
    %123 = vector.extract_strided_slice %122 {offsets = [0, 0], sizes = [8, 256], strides = [1, 1]} : vector<8x512xf32> to vector<8x256xf32>
    %124 = vector.broadcast %5 : vector<8x1xf32> to vector<8x256xf32>
    %125 = arith.addf %123, %124 : vector<8x256xf32>
    %126 = vector.extract_strided_slice %122 {offsets = [0, 256], sizes = [8, 256], strides = [1, 1]} : vector<8x512xf32> to vector<8x256xf32>
    %127 = vector.broadcast %5 : vector<8x1xf32> to vector<8x256xf32>
    %128 = arith.addf %126, %127 : vector<8x256xf32>
    %c0_46 = arith.constant 0 : index
    %c0_47 = arith.constant 0 : index
    %c0_48 = arith.constant 0 : index
    %129 = vector.load %arg2[%c0_46, %c0_47, %c0_48] : memref<2x8x2xf32, #tpu.memory_space<vmem>>, vector<1x8x2xf32>
    %130 = vector.shape_cast %129 : vector<1x8x2xf32> to vector<8x2xf32>
    %c1_49 = arith.constant 1 : index
    %c0_50 = arith.constant 0 : index
    %c0_51 = arith.constant 0 : index
    %131 = vector.load %arg2[%c1_49, %c0_50, %c0_51] : memref<2x8x2xf32, #tpu.memory_space<vmem>>, vector<1x8x2xf32>
    %132 = vector.shape_cast %131 : vector<1x8x2xf32> to vector<8x2xf32>
    %133 = vector.extract_strided_slice %130 {offsets = [0, 0], sizes = [8, 1], strides = [1, 1]} : vector<8x2xf32> to vector<8x1xf32>
    %cst_52 = arith.constant 1.000000e+00 : f32
    %134 = vector.broadcast %cst_52 : f32 to vector<8x1xf32>
    %135 = arith.addf %134, %133 : vector<8x1xf32>
    %136 = vector.broadcast %135 : vector<8x1xf32> to vector<8x256xf32>
    %137 = arith.mulf %125, %136 : vector<8x256xf32>
    %138 = vector.extract_strided_slice %130 {offsets = [0, 1], sizes = [8, 1], strides = [1, 1]} : vector<8x2xf32> to vector<8x1xf32>
    %139 = vector.broadcast %138 : vector<8x1xf32> to vector<8x256xf32>
    %140 = arith.addf %137, %139 : vector<8x256xf32>
    %141 = vector.extract_strided_slice %132 {offsets = [0, 0], sizes = [8, 1], strides = [1, 1]} : vector<8x2xf32> to vector<8x1xf32>
    %cst_53 = arith.constant 1.000000e+00 : f32
    %142 = vector.broadcast %cst_53 : f32 to vector<8x1xf32>
    %143 = arith.addf %142, %141 : vector<8x1xf32>
    %144 = vector.broadcast %143 : vector<8x1xf32> to vector<8x256xf32>
    %145 = arith.mulf %128, %144 : vector<8x256xf32>
    %146 = vector.extract_strided_slice %132 {offsets = [0, 1], sizes = [8, 1], strides = [1, 1]} : vector<8x2xf32> to vector<8x1xf32>
    %147 = vector.broadcast %146 : vector<8x1xf32> to vector<8x256xf32>
    %148 = arith.addf %145, %147 : vector<8x256xf32>
    %cst_54 = arith.constant dense<0.000000e+00> : vector<8xf32>
    %149 = vector.multi_reduction <add>, %140, %cst_54 [1] : vector<8x256xf32> to vector<8xf32>
    %150 = vector.shape_cast %149 : vector<8xf32> to vector<8x1xf32>
    %c0_55 = arith.constant 0 : index
    %c0_56 = arith.constant 0 : index
    %151 = vector.load %arg5[%c0_55, %c0_56] : memref<8x8xf32, #tpu.memory_space<vmem>>, vector<8x8xf32>
    %cst_57 = arith.constant dense<0.000000e+00> : vector<8x1xf32>
    %152 = tpu.matmul %151, %150, %cst_57 {dimension_numbers = #tpu.dot_dimension_numbers<[1], [0], [0], [1], [0, 0, 1, 1], [], []>} : vector<8x8xf32>, vector<8x1xf32>, vector<8x1xf32> -> vector<8x1xf32>
    %153 = vector.broadcast %152 : vector<8x1xf32> to vector<8x256xf32>
    %154 = arith.subf %140, %153 : vector<8x256xf32>
    %155 = arith.mulf %154, %154 : vector<8x256xf32>
    %cst_58 = arith.constant dense<0.000000e+00> : vector<8xf32>
    %156 = vector.multi_reduction <add>, %155, %cst_58 [1] : vector<8x256xf32> to vector<8xf32>
    %157 = vector.shape_cast %156 : vector<8xf32> to vector<8x1xf32>
    %c0_59 = arith.constant 0 : index
    %c0_60 = arith.constant 0 : index
    %158 = vector.load %arg5[%c0_59, %c0_60] : memref<8x8xf32, #tpu.memory_space<vmem>>, vector<8x8xf32>
    %cst_61 = arith.constant dense<0.000000e+00> : vector<8x1xf32>
    %159 = tpu.matmul %158, %157, %cst_61 {dimension_numbers = #tpu.dot_dimension_numbers<[1], [0], [0], [1], [0, 0, 1, 1], [], []>} : vector<8x8xf32>, vector<8x1xf32>, vector<8x1xf32> -> vector<8x1xf32>
    %cst_62 = arith.constant 9.99999974E-6 : f32
    %160 = vector.broadcast %cst_62 : f32 to vector<8x1xf32>
    %161 = arith.addf %159, %160 : vector<8x1xf32>
    %162 = math.rsqrt %161 : vector<8x1xf32>
    %163 = arith.mulf %3, %162 : vector<8x1xf32>
    %164 = vector.broadcast %163 : vector<8x1xf32> to vector<8x256xf32>
    %165 = arith.mulf %154, %164 : vector<8x256xf32>
    %166 = vector.broadcast %4 : vector<8x1xf32> to vector<8x256xf32>
    %167 = arith.addf %165, %166 : vector<8x256xf32>
    %168 = arith.negf %167 : vector<8x256xf32>
    %169 = math.exp %168 : vector<8x256xf32>
    %cst_63 = arith.constant 1.000000e+00 : f32
    %170 = vector.broadcast %cst_63 : f32 to vector<8x256xf32>
    %171 = arith.addf %170, %169 : vector<8x256xf32>
    %172 = arith.divf %170, %171 : vector<8x256xf32>
    %173 = arith.mulf %167, %172 : vector<8x256xf32>
    %cst_64 = arith.constant dense<0.000000e+00> : vector<8xf32>
    %174 = vector.multi_reduction <add>, %148, %cst_64 [1] : vector<8x256xf32> to vector<8xf32>
    %175 = vector.shape_cast %174 : vector<8xf32> to vector<8x1xf32>
    %c0_65 = arith.constant 0 : index
    %c0_66 = arith.constant 0 : index
    %176 = vector.load %arg5[%c0_65, %c0_66] : memref<8x8xf32, #tpu.memory_space<vmem>>, vector<8x8xf32>
    %cst_67 = arith.constant dense<0.000000e+00> : vector<8x1xf32>
    %177 = tpu.matmul %176, %175, %cst_67 {dimension_numbers = #tpu.dot_dimension_numbers<[1], [0], [0], [1], [0, 0, 1, 1], [], []>} : vector<8x8xf32>, vector<8x1xf32>, vector<8x1xf32> -> vector<8x1xf32>
    %178 = vector.broadcast %177 : vector<8x1xf32> to vector<8x256xf32>
    %179 = arith.subf %148, %178 : vector<8x256xf32>
    %180 = arith.mulf %179, %179 : vector<8x256xf32>
    %cst_68 = arith.constant dense<0.000000e+00> : vector<8xf32>
    %181 = vector.multi_reduction <add>, %180, %cst_68 [1] : vector<8x256xf32> to vector<8xf32>
    %182 = vector.shape_cast %181 : vector<8xf32> to vector<8x1xf32>
    %c0_69 = arith.constant 0 : index
    %c0_70 = arith.constant 0 : index
    %183 = vector.load %arg5[%c0_69, %c0_70] : memref<8x8xf32, #tpu.memory_space<vmem>>, vector<8x8xf32>
    %cst_71 = arith.constant dense<0.000000e+00> : vector<8x1xf32>
    %184 = tpu.matmul %183, %182, %cst_71 {dimension_numbers = #tpu.dot_dimension_numbers<[1], [0], [0], [1], [0, 0, 1, 1], [], []>} : vector<8x8xf32>, vector<8x1xf32>, vector<8x1xf32> -> vector<8x1xf32>
    %cst_72 = arith.constant 9.99999974E-6 : f32
    %185 = vector.broadcast %cst_72 : f32 to vector<8x1xf32>
    %186 = arith.addf %184, %185 : vector<8x1xf32>
    %187 = math.rsqrt %186 : vector<8x1xf32>
    %188 = arith.mulf %3, %187 : vector<8x1xf32>
    %189 = vector.broadcast %188 : vector<8x1xf32> to vector<8x256xf32>
    %190 = arith.mulf %179, %189 : vector<8x256xf32>
    %191 = vector.broadcast %4 : vector<8x1xf32> to vector<8x256xf32>
    %192 = arith.addf %190, %191 : vector<8x256xf32>
    %193 = arith.negf %192 : vector<8x256xf32>
    %194 = math.exp %193 : vector<8x256xf32>
    %cst_73 = arith.constant 1.000000e+00 : f32
    %195 = vector.broadcast %cst_73 : f32 to vector<8x256xf32>
    %196 = arith.addf %195, %194 : vector<8x256xf32>
    %197 = arith.divf %195, %196 : vector<8x256xf32>
    %198 = arith.mulf %192, %197 : vector<8x256xf32>
    %c17_i32_74 = arith.constant 17 : i32
    %199 = tpu.dynamic_rotate %173 by %c17_i32_74 dim 1 : vector<8x256xf32>, i32 -> vector<8x256xf32>
    %200 = vector.broadcast %7 : vector<1x256xf32> to vector<8x256xf32>
    %201 = arith.mulf %199, %200 : vector<8x256xf32>
    %c16_i32_75 = arith.constant 16 : i32
    %202 = tpu.dynamic_rotate %173 by %c16_i32_75 dim 1 : vector<8x256xf32>, i32 -> vector<8x256xf32>
    %203 = vector.broadcast %8 : vector<1x256xf32> to vector<8x256xf32>
    %204 = arith.mulf %202, %203 : vector<8x256xf32>
    %c15_i32_76 = arith.constant 15 : i32
    %205 = tpu.dynamic_rotate %173 by %c15_i32_76 dim 1 : vector<8x256xf32>, i32 -> vector<8x256xf32>
    %206 = vector.broadcast %9 : vector<1x256xf32> to vector<8x256xf32>
    %207 = arith.mulf %205, %206 : vector<8x256xf32>
    %c1_i32_77 = arith.constant 1 : i32
    %208 = tpu.dynamic_rotate %173 by %c1_i32_77 dim 1 : vector<8x256xf32>, i32 -> vector<8x256xf32>
    %209 = vector.broadcast %10 : vector<1x256xf32> to vector<8x256xf32>
    %210 = arith.mulf %208, %209 : vector<8x256xf32>
    %c255_i32_78 = arith.constant 255 : i32
    %211 = tpu.dynamic_rotate %173 by %c255_i32_78 dim 1 : vector<8x256xf32>, i32 -> vector<8x256xf32>
    %212 = vector.broadcast %11 : vector<1x256xf32> to vector<8x256xf32>
    %213 = arith.mulf %211, %212 : vector<8x256xf32>
    %c241_i32_79 = arith.constant 241 : i32
    %214 = tpu.dynamic_rotate %173 by %c241_i32_79 dim 1 : vector<8x256xf32>, i32 -> vector<8x256xf32>
    %215 = vector.broadcast %12 : vector<1x256xf32> to vector<8x256xf32>
    %216 = arith.mulf %214, %215 : vector<8x256xf32>
    %c240_i32_80 = arith.constant 240 : i32
    %217 = tpu.dynamic_rotate %173 by %c240_i32_80 dim 1 : vector<8x256xf32>, i32 -> vector<8x256xf32>
    %218 = vector.broadcast %13 : vector<1x256xf32> to vector<8x256xf32>
    %219 = arith.mulf %217, %218 : vector<8x256xf32>
    %c239_i32_81 = arith.constant 239 : i32
    %220 = tpu.dynamic_rotate %173 by %c239_i32_81 dim 1 : vector<8x256xf32>, i32 -> vector<8x256xf32>
    %221 = vector.broadcast %14 : vector<1x256xf32> to vector<8x256xf32>
    %222 = arith.mulf %220, %221 : vector<8x256xf32>
    %223 = tpu.concatenate %201, %204, %207, %210, %173, %213, %216, %219, %222 in 0 : vector<8x256xf32>, vector<8x256xf32>, vector<8x256xf32>, vector<8x256xf32>, vector<8x256xf32>, vector<8x256xf32>, vector<8x256xf32>, vector<8x256xf32>, vector<8x256xf32> -> vector<72x256xf32>
    %c17_i32_82 = arith.constant 17 : i32
    %224 = tpu.dynamic_rotate %198 by %c17_i32_82 dim 1 : vector<8x256xf32>, i32 -> vector<8x256xf32>
    %225 = vector.broadcast %7 : vector<1x256xf32> to vector<8x256xf32>
    %226 = arith.mulf %224, %225 : vector<8x256xf32>
    %c16_i32_83 = arith.constant 16 : i32
    %227 = tpu.dynamic_rotate %198 by %c16_i32_83 dim 1 : vector<8x256xf32>, i32 -> vector<8x256xf32>
    %228 = vector.broadcast %8 : vector<1x256xf32> to vector<8x256xf32>
    %229 = arith.mulf %227, %228 : vector<8x256xf32>
    %c15_i32_84 = arith.constant 15 : i32
    %230 = tpu.dynamic_rotate %198 by %c15_i32_84 dim 1 : vector<8x256xf32>, i32 -> vector<8x256xf32>
    %231 = vector.broadcast %9 : vector<1x256xf32> to vector<8x256xf32>
    %232 = arith.mulf %230, %231 : vector<8x256xf32>
    %c1_i32_85 = arith.constant 1 : i32
    %233 = tpu.dynamic_rotate %198 by %c1_i32_85 dim 1 : vector<8x256xf32>, i32 -> vector<8x256xf32>
    %234 = vector.broadcast %10 : vector<1x256xf32> to vector<8x256xf32>
    %235 = arith.mulf %233, %234 : vector<8x256xf32>
    %c255_i32_86 = arith.constant 255 : i32
    %236 = tpu.dynamic_rotate %198 by %c255_i32_86 dim 1 : vector<8x256xf32>, i32 -> vector<8x256xf32>
    %237 = vector.broadcast %11 : vector<1x256xf32> to vector<8x256xf32>
    %238 = arith.mulf %236, %237 : vector<8x256xf32>
    %c241_i32_87 = arith.constant 241 : i32
    %239 = tpu.dynamic_rotate %198 by %c241_i32_87 dim 1 : vector<8x256xf32>, i32 -> vector<8x256xf32>
    %240 = vector.broadcast %12 : vector<1x256xf32> to vector<8x256xf32>
    %241 = arith.mulf %239, %240 : vector<8x256xf32>
    %c240_i32_88 = arith.constant 240 : i32
    %242 = tpu.dynamic_rotate %198 by %c240_i32_88 dim 1 : vector<8x256xf32>, i32 -> vector<8x256xf32>
    %243 = vector.broadcast %13 : vector<1x256xf32> to vector<8x256xf32>
    %244 = arith.mulf %242, %243 : vector<8x256xf32>
    %c239_i32_89 = arith.constant 239 : i32
    %245 = tpu.dynamic_rotate %198 by %c239_i32_89 dim 1 : vector<8x256xf32>, i32 -> vector<8x256xf32>
    %246 = vector.broadcast %14 : vector<1x256xf32> to vector<8x256xf32>
    %247 = arith.mulf %245, %246 : vector<8x256xf32>
    %248 = tpu.concatenate %226, %229, %232, %235, %198, %238, %241, %244, %247 in 0 : vector<8x256xf32>, vector<8x256xf32>, vector<8x256xf32>, vector<8x256xf32>, vector<8x256xf32>, vector<8x256xf32>, vector<8x256xf32>, vector<8x256xf32>, vector<8x256xf32> -> vector<72x256xf32>
    %249 = tpu.concatenate %223, %248 in 1 : vector<72x256xf32>, vector<72x256xf32> -> vector<72x512xf32>
    %c0_90 = arith.constant 0 : index
    %c0_91 = arith.constant 0 : index
    %250 = vector.load %arg7[%c0_90, %c0_91] : memref<8x72xbf16, #tpu.memory_space<vmem>>, vector<8x72xbf16>
    %251 = arith.truncf %249 : vector<72x512xf32> to vector<72x512xbf16>
    %cst_92 = arith.constant dense<0.000000e+00> : vector<8x512xf32>
    %252 = tpu.matmul %250, %251, %cst_92 {dimension_numbers = #tpu.dot_dimension_numbers<[1], [0], [0], [1], [0, 0, 1, 1], [], []>} : vector<8x72xbf16>, vector<72x512xbf16>, vector<8x512xf32> -> vector<8x512xf32>
    %253 = vector.extract_strided_slice %252 {offsets = [0, 0], sizes = [8, 256], strides = [1, 1]} : vector<8x512xf32> to vector<8x256xf32>
    %254 = vector.broadcast %6 : vector<8x1xf32> to vector<8x256xf32>
    %255 = arith.addf %253, %254 : vector<8x256xf32>
    %256 = vector.extract_strided_slice %252 {offsets = [0, 256], sizes = [8, 256], strides = [1, 1]} : vector<8x512xf32> to vector<8x256xf32>
    %257 = vector.broadcast %6 : vector<8x1xf32> to vector<8x256xf32>
    %258 = arith.addf %256, %257 : vector<8x256xf32>
    %259 = vector.extract_strided_slice %0 {offsets = [0, 6], sizes = [8, 1], strides = [1, 1]} : vector<8x7xf32> to vector<8x1xf32>
    %260 = tpu.concatenate %16, %18 in 1 : vector<8x256xf32>, vector<8x256xf32> -> vector<8x512xf32>
    %c0_93 = arith.constant 0 : index
    %c0_94 = arith.constant 0 : index
    %261 = vector.load %arg9[%c0_93, %c0_94] : memref<8x8xbf16, #tpu.memory_space<vmem>>, vector<8x8xbf16>
    %262 = arith.truncf %260 : vector<8x512xf32> to vector<8x512xbf16>
    %cst_95 = arith.constant dense<0.000000e+00> : vector<8x512xf32>
    %263 = tpu.matmul %261, %262, %cst_95 {dimension_numbers = #tpu.dot_dimension_numbers<[1], [0], [0], [1], [0, 0, 1, 1], [], []>} : vector<8x8xbf16>, vector<8x512xbf16>, vector<8x512xf32> -> vector<8x512xf32>
    %264 = vector.extract_strided_slice %263 {offsets = [0, 0], sizes = [8, 256], strides = [1, 1]} : vector<8x512xf32> to vector<8x256xf32>
    %265 = vector.broadcast %259 : vector<8x1xf32> to vector<8x256xf32>
    %266 = arith.addf %264, %265 : vector<8x256xf32>
    %267 = vector.extract_strided_slice %263 {offsets = [0, 256], sizes = [8, 256], strides = [1, 1]} : vector<8x512xf32> to vector<8x256xf32>
    %268 = vector.broadcast %259 : vector<8x1xf32> to vector<8x256xf32>
    %269 = arith.addf %267, %268 : vector<8x256xf32>
    %270 = arith.addf %255, %266 : vector<8x256xf32>
    %c0_96 = arith.constant 0 : index
    %c0_97 = arith.constant 0 : index
    %c0_98 = arith.constant 0 : index
    %271 = vector.load %arg10[%c0_96, %c0_97, %c0_98] : memref<2x8x256xf32, #tpu.memory_space<vmem>>, vector<1x8x256xf32>
    %272 = vector.shape_cast %271 : vector<1x8x256xf32> to vector<8x256xf32>
    %273 = vector.shape_cast %270 : vector<8x256xf32> to vector<1x8x256xf32>
    tpu.vector_store %arg10[%c0_96, %c0_97, %c0_98], %273 {strides = array<i32>} : memref<2x8x256xf32, #tpu.memory_space<vmem>>, vector<1x8x256xf32>,
    %274 = arith.addf %258, %269 : vector<8x256xf32>
    %c1_99 = arith.constant 1 : index
    %c0_100 = arith.constant 0 : index
    %c0_101 = arith.constant 0 : index
    %275 = vector.load %arg10[%c1_99, %c0_100, %c0_101] : memref<2x8x256xf32, #tpu.memory_space<vmem>>, vector<1x8x256xf32>
    %276 = vector.shape_cast %275 : vector<1x8x256xf32> to vector<8x256xf32>
    %277 = vector.shape_cast %274 : vector<8x256xf32> to vector<1x8x256xf32>
    tpu.vector_store %arg10[%c1_99, %c0_100, %c0_101], %277 {strides = array<i32>} : memref<2x8x256xf32, #tpu.memory_space<vmem>>, vector<1x8x256xf32>,
    return
  }
  func.func @transform_0(%arg0: i32) -> (i32, i32, i32) {
    %c0_i32 = arith.constant 0 : i32
    %c0_i32_0 = arith.constant 0 : i32
    %c0_i32_1 = arith.constant 0 : i32
    return %arg0, %c0_i32, %c0_i32_0 : i32, i32, i32
  }
  func.func @transform_1(%arg0: i32) -> (i32, i32, i32) {
    %c0_i32 = arith.constant 0 : i32
    %c0_i32_0 = arith.constant 0 : i32
    %c0_i32_1 = arith.constant 0 : i32
    return %arg0, %c0_i32, %c0_i32_0 : i32, i32, i32
  }
  func.func @transform_2(%arg0: i32) -> (i32, i32) {
    %c0_i32 = arith.constant 0 : i32
    %c0_i32_0 = arith.constant 0 : i32
    %c0_i32_1 = arith.constant 0 : i32
    return %c0_i32, %c0_i32_0 : i32, i32
  }
  func.func @transform_3(%arg0: i32) -> (i32, i32) {
    %c0_i32 = arith.constant 0 : i32
    %c0_i32_0 = arith.constant 0 : i32
    %c0_i32_1 = arith.constant 0 : i32
    return %c0_i32, %c0_i32_0 : i32, i32
  }
  func.func @transform_4(%arg0: i32) -> (i32, i32) {
    %c0_i32 = arith.constant 0 : i32
    %c0_i32_0 = arith.constant 0 : i32
    %c0_i32_1 = arith.constant 0 : i32
    return %c0_i32, %c0_i32_0 : i32, i32
  }
  func.func @transform_5(%arg0: i32) -> (i32, i32) {
    %c0_i32 = arith.constant 0 : i32
    %c0_i32_0 = arith.constant 0 : i32
    %c0_i32_1 = arith.constant 0 : i32
    return %c0_i32, %c0_i32_0 : i32, i32
  }
  func.func @transform_6(%arg0: i32) -> (i32, i32) {
    %c0_i32 = arith.constant 0 : i32
    %c0_i32_0 = arith.constant 0 : i32
    %c0_i32_1 = arith.constant 0 : i32
    return %c0_i32, %c0_i32_0 : i32, i32
  }
  func.func @transform_7(%arg0: i32) -> (i32, i32) {
    %c0_i32 = arith.constant 0 : i32
    %c0_i32_0 = arith.constant 0 : i32
    %c0_i32_1 = arith.constant 0 : i32
    return %c0_i32, %c0_i32_0 : i32, i32
  }
  func.func @transform_8(%arg0: i32) -> (i32, i32) {
    %c0_i32 = arith.constant 0 : i32
    %c0_i32_0 = arith.constant 0 : i32
    %c0_i32_1 = arith.constant 0 : i32
    return %c0_i32, %c0_i32_0 : i32, i32
  }
  func.func @transform_9(%arg0: i32) -> (i32, i32, i32) {
    %c0_i32 = arith.constant 0 : i32
    %c0_i32_0 = arith.constant 0 : i32
    %c0_i32_1 = arith.constant 0 : i32
    return %arg0, %c0_i32, %c0_i32_0 : i32, i32, i32
  }
}

</mosaic_0001>

<llo_original>
// kernel: tpu_custom_call.1
$region0: #{tpu_custom_call.1}
  #allocation0 [shape = 'u32[]', space=smem, size = 0x4, offset = 0x4, fixed_abs, tag = 'smem constant byte address 0x4 - core index']
  #allocation1 [shape = 'u32[144,128]{1,0:T(1,128)}', space=vmem, size = 0x12000, scoped, tag = 'internal scratch']
  %s0 = inlined_call_operand.hbm [shape: f32[2,8,256], index: 0, kind: input, shape index: {}]
  %s1 = inlined_call_operand.vmem [shape: f32[2,8,2], index: 1, kind: input, shape index: {}]
  %s2 = inlined_call_operand.hbm [shape: f32[8,7], index: 2, kind: input, shape index: {}]
  %s3 = inlined_call_operand.hbm [shape: f32[8,8], index: 3, kind: input, shape index: {}]
  %s4 = inlined_call_operand.hbm [shape: f32[8,8], index: 4, kind: input, shape index: {}]
  %s5 = inlined_call_operand.hbm [shape: bf16[8,72], index: 5, kind: input, shape index: {}]
  %s6 = inlined_call_operand.hbm [shape: bf16[8,72], index: 6, kind: input, shape index: {}]
  %s7 = inlined_call_operand.vmem [shape: f32[9,256], index: 7, kind: input, shape index: {}]
  %s8 = inlined_call_operand.hbm [shape: bf16[8,8], index: 8, kind: input, shape index: {}]
  %s9 = inlined_call_operand.hbm [shape: f32[2,8,256], index: 9, kind: output, shape index: {}]
  %s10 = sld [smem:[#allocation0]]
  $region74: #{tpu_custom_call.1} parent=0
    _
  %s12 = ssub.s32 1, %s10
  %s13 = scalar_select 0, %s12, %s10
  $region1: #{tpu_custom_call.1} parent=0
    #allocation2 [shape = 'u8[16384]{0}', space=vmem, size = 0x4000, scoped, tag = 'input window, operand 0, single buffered']
    #allocation3 [shape = 's32[1]{0}', space=sflag, size = 0x4, scoped, tag = 'scoped memory for tpu_custom_call.1']
    #allocation4 [shape = 's32[1]{0}', space=sflag, size = 0x4, scoped, tag = 'scoped memory for tpu_custom_call.1']
    #allocation5 [shape = 'u8[4096]{0}', space=vmem, size = 0x1000, scoped, tag = 'input window, operand 2, single buffered']
    #allocation6 [shape = 's32[1]{0}', space=sflag, size = 0x4, scoped, tag = 'scoped memory for tpu_custom_call.1']
    #allocation7 [shape = 'u8[4096]{0}', space=vmem, size = 0x1000, scoped, tag = 'input window, operand 3, single buffered']
    #allocation8 [shape = 'u8[4096]{0}', space=vmem, size = 0x1000, scoped, tag = 'input window, operand 4, single buffered']
    #allocation9 [shape = 's32[1]{0}', space=sflag, size = 0x4, scoped, tag = 'scoped memory for tpu_custom_call.1']
    #allocation10 [shape = 'u8[2048]{0}', space=vmem, size = 0x800, scoped, tag = 'input window, operand 5, single buffered']
    #allocation11 [shape = 'u8[2048]{0}', space=vmem, size = 0x800, scoped, tag = 'input window, operand 6, single buffered']
    #allocation12 [shape = 's32[1]{0}', space=sflag, size = 0x4, scoped, tag = 'scoped memory for tpu_custom_call.1']
    #allocation13 [shape = 'u8[2048]{0}', space=vmem, size = 0x800, scoped, tag = 'input window, operand 8, single buffered']
    #allocation14 [shape = 'u8[16384]{0}', space=vmem, size = 0x4000, scoped, tag = 'output window, operand 0, single buffered']
    %14 = vsyncpa [#allocation3], 0
    %15 = vsyncpa [#allocation6], 0
    %16 = vsyncpa [#allocation9], 0
    %17 = vsyncpa [#allocation12], 0
    %18 = vsyncpa [#allocation4], 0
    // Predicated region
    $region2: #{tpu_custom_call.1} parent=1 // pred_check
      _
    $region3: #{tpu_custom_call.1} parent=1 // pred_check_branch
      %20 = sbr.rel (0) target = $region5
    $region4: #{tpu_custom_call.1} parent=1 // pred_region
      %s22 = ssub.s32 512, 512
      %23 = vsyncadd [#allocation3], %s22
      %s24 = sshll.u32 [#allocation2], 4
      %s25 = int_to_ptr.vmem [resolvable:$true] %s24
      %30 = dma.hbm_to_vmem [thread:$0]  %s0, 512, %s25, [#allocation3], 256, 256, 16
    $region5: #{tpu_custom_call.1} parent=1 // pred_fallthru
      _
    // Predicated region
    $region6: #{tpu_custom_call.1} parent=1 // pred_check
      _
    $region7: #{tpu_custom_call.1} parent=1 // pred_check_branch
      %32 = sbr.rel (0) target = $region9
    $region8: #{tpu_custom_call.1} parent=1 // pred_region
      _
    $region9: #{tpu_custom_call.1} parent=1 // pred_fallthru
      _
    // Predicated region
    $region10: #{tpu_custom_call.1} parent=1 // pred_check
      _
    $region11: #{tpu_custom_call.1} parent=1 // pred_check_branch
      %34 = sbr.rel (0) target = $region13
    $region12: #{tpu_custom_call.1} parent=1 // pred_region
      %s36 = ssub.s32 128, 128
      %37 = vsyncadd [#allocation6], %s36
      %s39 = sshll.u32 [#allocation5], 4
      %s40 = int_to_ptr.vmem [resolvable:$true] %s39
      %42 = dma.hbm_to_vmem [thread:$0]  %s2, 128, %s40, [#allocation6]
    $region13: #{tpu_custom_call.1} parent=1 // pred_fallthru
      _
    // Predicated region
    $region14: #{tpu_custom_call.1} parent=1 // pred_check
      _
    $region15: #{tpu_custom_call.1} parent=1 // pred_check_branch
      %44 = sbr.rel (0) target = $region17
    $region16: #{tpu_custom_call.1} parent=1 // pred_region
      %s46 = ssub.s32 128, 128
      %47 = vsyncadd [#allocation6], %s46
      %s49 = sshll.u32 [#allocation7], 4
      %s50 = int_to_ptr.vmem [resolvable:$true] %s49
      %52 = dma.hbm_to_vmem [thread:$0]  %s3, 128, %s50, [#allocation6]
    $region17: #{tpu_custom_call.1} parent=1 // pred_fallthru
      _
    // Predicated region
    $region18: #{tpu_custom_call.1} parent=1 // pred_check
      _
    $region19: #{tpu_custom_call.1} parent=1 // pred_check_branch
      %54 = sbr.rel (0) target = $region21
    $region20: #{tpu_custom_call.1} parent=1 // pred_region
      %s56 = ssub.s32 128, 128
      %57 = vsyncadd [#allocation9], %s56
      %s59 = sshll.u32 [#allocation8], 4
      %s60 = int_to_ptr.vmem [resolvable:$true] %s59
      %62 = dma.hbm_to_vmem [thread:$0]  %s4, 128, %s60, [#allocation9]
    $region21: #{tpu_custom_call.1} parent=1 // pred_fallthru
      _
    // Predicated region
    $region22: #{tpu_custom_call.1} parent=1 // pred_check
      _
    $region23: #{tpu_custom_call.1} parent=1 // pred_check_branch
      %64 = sbr.rel (0) target = $region25
    $region24: #{tpu_custom_call.1} parent=1 // pred_region
      %s66 = ssub.s32 64, 64
      %67 = vsyncadd [#allocation9], %s66
      %s69 = sshll.u32 [#allocation10], 4
      %s70 = int_to_ptr.vmem [resolvable:$true] %s69
      %72 = dma.hbm_to_vmem [thread:$0]  %s5, 64, %s70, [#allocation9]
    $region25: #{tpu_custom_call.1} parent=1 // pred_fallthru
      _
    // Predicated region
    $region26: #{tpu_custom_call.1} parent=1 // pred_check
      _
    $region27: #{tpu_custom_call.1} parent=1 // pred_check_branch
      %74 = sbr.rel (0) target = $region29
    $region28: #{tpu_custom_call.1} parent=1 // pred_region
      %s76 = ssub.s32 64, 64
      %77 = vsyncadd [#allocation12], %s76
      %s79 = sshll.u32 [#allocation11], 4
      %s80 = int_to_ptr.vmem [resolvable:$true] %s79
      %82 = dma.hbm_to_vmem [thread:$0]  %s6, 64, %s80, [#allocation12]
    $region29: #{tpu_custom_call.1} parent=1 // pred_fallthru
      _
    // Predicated region
    $region30: #{tpu_custom_call.1} parent=1 // pred_check
      _
    $region31: #{tpu_custom_call.1} parent=1 // pred_check_branch
      %84 = sbr.rel (0) target = $region33
    $region32: #{tpu_custom_call.1} parent=1 // pred_region
      _
    $region33: #{tpu_custom_call.1} parent=1 // pred_fallthru
      _
    // Predicated region
    $region34: #{tpu_custom_call.1} parent=1 // pred_check
      _
    $region35: #{tpu_custom_call.1} parent=1 // pred_check_branch
      %86 = sbr.rel (0) target = $region37
    $region36: #{tpu_custom_call.1} parent=1 // pred_region
      %s88 = ssub.s32 64, 64
      %89 = vsyncadd [#allocation12], %s88
      %s91 = sshll.u32 [#allocation13], 4
      %s92 = int_to_ptr.vmem [resolvable:$true] %s91
      %94 = dma.hbm_to_vmem [thread:$0]  %s8, 64, %s92, [#allocation12]
    $region37: #{tpu_custom_call.1} parent=1 // pred_fallthru
      _
    // Predicated region
    $region38: #{tpu_custom_call.1} parent=1 // pred_check
      _
    $region39: #{tpu_custom_call.1} parent=1 // pred_check_branch
      %96 = sbr.rel (0) target = $region41
    $region40: #{tpu_custom_call.1} parent=1 // pred_region
      %97 = dma.done [#allocation3], 512
    $region41: #{tpu_custom_call.1} parent=1 // pred_fallthru
      _
    // Predicated region
    $region42: #{tpu_custom_call.1} parent=1 // pred_check
      _
    $region43: #{tpu_custom_call.1} parent=1 // pred_check_branch
      %99 = sbr.rel (0) target = $region45
    $region44: #{tpu_custom_call.1} parent=1 // pred_region
      %100 = dma.done [#allocation6], 128
    $region45: #{tpu_custom_call.1} parent=1 // pred_fallthru
      _
    // Predicated region
    $region46: #{tpu_custom_call.1} parent=1 // pred_check
      _
    $region47: #{tpu_custom_call.1} parent=1 // pred_check_branch
      %102 = sbr.rel (0) target = $region49
    $region48: #{tpu_custom_call.1} parent=1 // pred_region
      %103 = dma.done [#allocation6], 128
    $region49: #{tpu_custom_call.1} parent=1 // pred_fallthru
      _
    // Predicated region
    $region50: #{tpu_custom_call.1} parent=1 // pred_check
      _
    $region51: #{tpu_custom_call.1} parent=1 // pred_check_branch
      %105 = sbr.rel (0) target = $region53
    $region52: #{tpu_custom_call.1} parent=1 // pred_region
      %106 = dma.done [#allocation9], 128
    $region53: #{tpu_custom_call.1} parent=1 // pred_fallthru
      _
    // Predicated region
    $region54: #{tpu_custom_call.1} parent=1 // pred_check
      _
    $region55: #{tpu_custom_call.1} parent=1 // pred_check_branch
      %108 = sbr.rel (0) target = $region57
    $region56: #{tpu_custom_call.1} parent=1 // pred_region
      %109 = dma.done [#allocation9], 64
    $region57: #{tpu_custom_call.1} parent=1 // pred_fallthru
      _
    // Predicated region
    $region58: #{tpu_custom_call.1} parent=1 // pred_check
      _
    $region59: #{tpu_custom_call.1} parent=1 // pred_check_branch
      %111 = sbr.rel (0) target = $region61
    $region60: #{tpu_custom_call.1} parent=1 // pred_region
      %112 = dma.done [#allocation12], 64
    $region61: #{tpu_custom_call.1} parent=1 // pred_fallthru
      _
    // Predicated region
    $region62: #{tpu_custom_call.1} parent=1 // pred_check
      _
    $region63: #{tpu_custom_call.1} parent=1 // pred_check_branch
      %114 = sbr.rel (0) target = $region65
    $region64: #{tpu_custom_call.1} parent=1 // pred_region
      %115 = dma.done [#allocation12], 64
    $region65: #{tpu_custom_call.1} parent=1 // pred_fallthru
      _
    %v117 = vld [vmem:[#allocation5] sm:$0xff]
    %v118 = vld [vmem:[%s7] ss:$8 sm:$0x3]
    %s119 = scalar_lea.vmem %s7, 1
    %v120 = vld [vmem:[%s119] ss:$8 sm:$0x3]
    %s121 = scalar_lea.vmem %s7, 2
    %v122 = vld [vmem:[%s121] ss:$8 sm:$0x3]
    %s123 = scalar_lea.vmem %s7, 3
    %v124 = vld [vmem:[%s123] ss:$8 sm:$0x3]
    %s125 = scalar_lea.vmem %s7, 5
    %v126 = vld [vmem:[%s125] ss:$8 sm:$0x3]
    %s127 = scalar_lea.vmem %s7, 6
    %v128 = vld [vmem:[%s127] ss:$8 sm:$0x3]
    %s129 = scalar_lea.vmem %s7, 7
    %v130 = vld [vmem:[%s129] ss:$8 sm:$0x3]
    %s131 = scalar_lea.vmem %s7, 16
    %v132 = vld [vmem:[%s131] ss:$8 sm:$0x3]
    %v133 = vld [vmem:[#allocation2] sm:$0xff]
    %v134 = vld [vmem:[#allocation2 + $0x8] sm:$0xff]
    %s135 = scalar_lea.vmem [#allocation2], 16
    %v136 = vld [vmem:[%s135] sm:$0xff]
    %v137 = vld [vmem:[%s135 + $0x8] sm:$0xff]
    %v138 = vadd.f32 %v133, %v134
    %139 = vadd.xlane.f32.xlu0 %v138
    %v140 = vpop.xlane.xlu0 %139
    %v141 = vld [vmem:[#allocation7] sm:$0xff]
    %vm142 = vcmask 64512
    %v144 = vsel %vm142, %v141, 0
    %146 = vmatprep.subr.mxu0 0.0
    %147 = vmatpush1.msra.mxu0 0.0
    %148 = vmatprep.subr.mxu0 0.0
    %149 = vmatpush1.msra.mxu0 0.0
    %150 = vmatprep.subr.mxu0 0.0
    %151 = vmatpush1.msra.mxu0 0.0
    %152 = vmatprep.subr.mxu0 0.0
    %153 = vmatpush1.msra.mxu0 0.0
    %154 = vmatprep.subr.mxu0 0.0
    %155 = vmatpush1.msra.mxu0 0.0
    %156 = vmatprep.subr.mxu0 0.0
    %157 = vmatpush1.msra.mxu0 0.0
    %158 = vmatprep.subr.mxu0 0.0
    %159 = vmatpush1.msra.mxu0 0.0
    %160 = vmatprep.subr.mxu0 0.0
    %161 = vmatpush1.msra.mxu0 0.0
    %162 = vmatprep.subr.mxu0 0.0
    %163 = vmatpush1.msra.mxu0 0.0
    %164 = vmatprep.subr.mxu0 0.0
    %165 = vmatpush1.msra.mxu0 0.0
    %166 = vmatprep.subr.mxu0 0.0
    %167 = vmatpush1.msra.mxu0 0.0
    %168 = vmatprep.subr.mxu0 0.0
    %169 = vmatpush1.msra.mxu0 0.0
    %170 = vmatprep.subr.mxu0 0.0
    %171 = vmatpush1.msra.mxu0 0.0
    %172 = vmatprep.subr.mxu0 0.0
    %173 = vmatpush1.msra.mxu0 0.0
    %174 = vmatprep.subr.mxu0 0.0
    %175 = vmatpush1.msra.mxu0 0.0
    %176 = vmatprep.subr.mxu0 0.0
    %177 = vmatpush1.msra.mxu0 %v140
    %178 = vmatprep.subr.mxu0 0.0
    %179 = vmatpush2.msra.mxu0 0.0
    %180 = vmatprep.subr.mxu0 0.0
    %181 = vmatpush2.msra.mxu0 0.0
    %182 = vmatprep.subr.mxu0 0.0
    %183 = vmatpush2.msra.mxu0 0.0
    %184 = vmatprep.subr.mxu0 0.0
    %185 = vmatpush2.msra.mxu0 0.0
    %186 = vmatprep.subr.mxu0 0.0
    %187 = vmatpush2.msra.mxu0 0.0
    %188 = vmatprep.subr.mxu0 0.0
    %189 = vmatpush2.msra.mxu0 0.0
    %190 = vmatprep.subr.mxu0 0.0
    %191 = vmatpush2.msra.mxu0 0.0
    %192 = vmatprep.subr.mxu0 0.0
    %193 = vmatpush2.msra.mxu0 0.0
    %194 = vmatprep.subr.mxu0 0.0
    %195 = vmatpush2.msra.mxu0 0.0
    %196 = vmatprep.subr.mxu0 0.0
    %197 = vmatpush2.msra.mxu0 0.0
    %198 = vmatprep.subr.mxu0 0.0
    %199 = vmatpush2.msra.mxu0 0.0
    %200 = vmatprep.subr.mxu0 0.0
    %201 = vmatpush2.msra.mxu0 0.0
    %202 = vmatprep.subr.mxu0 0.0
    %203 = vmatpush2.msra.mxu0 0.0
    %204 = vmatprep.subr.mxu0 0.0
    %205 = vmatpush2.msra.mxu0 0.0
    %206 = vmatprep.subr.mxu0 0.0
    %207 = vmatpush2.msra.mxu0 0.0
    %208 = vmatprep.subr.mxu0 0.0
    %209 = vmatpush2.msra.mxu0 0.0
    %210 = vmatprep.mubr.f32.mxu0 0.0
    %211 = vmatmul.mubr.f32.gmra.mxu0 %v144
    %v212 = vpop.f32.mrf.mxu0
    %v213 = vadd.f32 0.0, %v212
    %v214 = vpop.f32.mrf.mxu0
    %215 = vdwg.mxu0
    %217 = vset.pattern.permute.xlu0 0
    %218 = vperm.xlu0 %217, %v213
    %v219 = vpop.permute.xlu0 %218
    %v221 = vsub.f32 %v133, %v219
    %v222 = vsub.f32 %v134, %v219
    %v223 = vmul.f32 %v221, %v221
    %v224 = vmul.f32 %v222, %v222
    %v225 = vadd.f32 %v223, %v224
    %226 = vadd.xlane.f32.xlu0 %v225
    %v227 = vpop.xlane.xlu0 %226
    %228 = vmatprep.subr.mxu0 0.0
    %229 = vmatpush1.msra.mxu0 0.0
    %230 = vmatprep.subr.mxu0 0.0
    %231 = vmatpush1.msra.mxu0 0.0
    %232 = vmatprep.subr.mxu0 0.0
    %233 = vmatpush1.msra.mxu0 0.0
    %234 = vmatprep.subr.mxu0 0.0
    %235 = vmatpush1.msra.mxu0 0.0
    %236 = vmatprep.subr.mxu0 0.0
    %237 = vmatpush1.msra.mxu0 0.0
    %238 = vmatprep.subr.mxu0 0.0
    %239 = vmatpush1.msra.mxu0 0.0
    %240 = vmatprep.subr.mxu0 0.0
    %241 = vmatpush1.msra.mxu0 0.0
    %242 = vmatprep.subr.mxu0 0.0
    %243 = vmatpush1.msra.mxu0 0.0
    %244 = vmatprep.subr.mxu0 0.0
    %245 = vmatpush1.msra.mxu0 0.0
    %246 = vmatprep.subr.mxu0 0.0
    %247 = vmatpush1.msra.mxu0 0.0
    %248 = vmatprep.subr.mxu0 0.0
    %249 = vmatpush1.msra.mxu0 0.0
    %250 = vmatprep.subr.mxu0 0.0
    %251 = vmatpush1.msra.mxu0 0.0
    %252 = vmatprep.subr.mxu0 0.0
    %253 = vmatpush1.msra.mxu0 0.0
    %254 = vmatprep.subr.mxu0 0.0
    %255 = vmatpush1.msra.mxu0 0.0
    %256 = vmatprep.subr.mxu0 0.0
    %257 = vmatpush1.msra.mxu0 0.0
    %258 = vmatprep.subr.mxu0 0.0
    %259 = vmatpush1.msra.mxu0 %v227
    %260 = vmatprep.subr.mxu0 0.0
    %261 = vmatpush2.msra.mxu0 0.0
    %262 = vmatprep.subr.mxu0 0.0
    %263 = vmatpush2.msra.mxu0 0.0
    %264 = vmatprep.subr.mxu0 0.0
    %265 = vmatpush2.msra.mxu0 0.0
    %266 = vmatprep.subr.mxu0 0.0
    %267 = vmatpush2.msra.mxu0 0.0
    %268 = vmatprep.subr.mxu0 0.0
    %269 = vmatpush2.msra.mxu0 0.0
    %270 = vmatprep.subr.mxu0 0.0
    %271 = vmatpush2.msra.mxu0 0.0
    %272 = vmatprep.subr.mxu0 0.0
    %273 = vmatpush2.msra.mxu0 0.0
    %274 = vmatprep.subr.mxu0 0.0
    %275 = vmatpush2.msra.mxu0 0.0
    %276 = vmatprep.subr.mxu0 0.0
    %277 = vmatpush2.msra.mxu0 0.0
    %278 = vmatprep.subr.mxu0 0.0
    %279 = vmatpush2.msra.mxu0 0.0
    %280 = vmatprep.subr.mxu0 0.0
    %281 = vmatpush2.msra.mxu0 0.0
    %282 = vmatprep.subr.mxu0 0.0
    %283 = vmatpush2.msra.mxu0 0.0
    %284 = vmatprep.subr.mxu0 0.0
    %285 = vmatpush2.msra.mxu0 0.0
    %286 = vmatprep.subr.mxu0 0.0
    %287 = vmatpush2.msra.mxu0 0.0
    %288 = vmatprep.subr.mxu0 0.0
    %289 = vmatpush2.msra.mxu0 0.0
    %290 = vmatprep.subr.mxu0 0.0
    %291 = vmatpush2.msra.mxu0 0.0
    %292 = vmatprep.mubr.f32.mxu0 0.0
    %293 = vmatmul.mubr.f32.gmra.mxu0 %v144
    %v294 = vpop.f32.mrf.mxu0
    %v295 = vadd.f32 1e-05, %v294
    %v296 = vpop.f32.mrf.mxu0
    %297 = vdwg.mxu0
    %v298 = vrsqrt.pop %v295
    %v299 = vmul.f32 %v117, %v298
    %301 = vset.pattern.permute.xlu0 0
    %302 = vperm.xlu0 %301, %v299
    %v303 = vpop.permute.xlu0 %302
    %v305 = vmul.f32 %v221, %v303
    %v306 = vmul.f32 %v222, %v303
    %308 = vset.pattern.permute.xlu0 1
    %309 = vperm.xlu0 %308, %v117
    %v310 = vpop.permute.xlu0 %309
    %v312 = vadd.f32 %v305, %v310
    %v313 = vadd.f32 %v306, %v310
    %v314 = vxor.u32 %v312, 2147483648
    %v315 = vxor.u32 %v313, 2147483648
    %v316 = vmul.f32 %v314, 1.442695
    %v317 = vpow.pop %v316
    %v318 = vmul.f32 %v315, 1.442695
    %v319 = vpow.pop %v318
    %v320 = vadd.f32 %v317, 1.0
    %v321 = vadd.f32 %v319, 1.0
    %v322 = vrcp.pop %v320
    %v323 = vmul.f32 1.0, %v322
    %v324 = vrcp.pop %v321
    %v325 = vmul.f32 1.0, %v324
    %v326 = vmul.f32 %v312, %v323
    %v327 = vmul.f32 %v313, %v325
    %v328 = vadd.f32 %v136, %v137
    %329 = vadd.xlane.f32.xlu0 %v328
    %v330 = vpop.xlane.xlu0 %329
    %331 = vmatprep.subr.mxu0 0.0
    %332 = vmatpush1.msra.mxu0 0.0
    %333 = vmatprep.subr.mxu0 0.0
    %334 = vmatpush1.msra.mxu0 0.0
    %335 = vmatprep.subr.mxu0 0.0
    %336 = vmatpush1.msra.mxu0 0.0
    %337 = vmatprep.subr.mxu0 0.0
    %338 = vmatpush1.msra.mxu0 0.0
    %339 = vmatprep.subr.mxu0 0.0
    %340 = vmatpush1.msra.mxu0 0.0
    %341 = vmatprep.subr.mxu0 0.0
    %342 = vmatpush1.msra.mxu0 0.0
    %343 = vmatprep.subr.mxu0 0.0
    %344 = vmatpush1.msra.mxu0 0.0
    %345 = vmatprep.subr.mxu0 0.0
    %346 = vmatpush1.msra.mxu0 0.0
    %347 = vmatprep.subr.mxu0 0.0
    %348 = vmatpush1.msra.mxu0 0.0
    %349 = vmatprep.subr.mxu0 0.0
    %350 = vmatpush1.msra.mxu0 0.0
    %351 = vmatprep.subr.mxu0 0.0
    %352 = vmatpush1.msra.mxu0 0.0
    %353 = vmatprep.subr.mxu0 0.0
    %354 = vmatpush1.msra.mxu0 0.0
    %355 = vmatprep.subr.mxu0 0.0
    %356 = vmatpush1.msra.mxu0 0.0
    %357 = vmatprep.subr.mxu0 0.0
    %358 = vmatpush1.msra.mxu0 0.0
    %359 = vmatprep.subr.mxu0 0.0
    %360 = vmatpush1.msra.mxu0 0.0
    %361 = vmatprep.subr.mxu0 0.0
    %362 = vmatpush1.msra.mxu0 %v330
    %363 = vmatprep.subr.mxu0 0.0
    %364 = vmatpush2.msra.mxu0 0.0
    %365 = vmatprep.subr.mxu0 0.0
    %366 = vmatpush2.msra.mxu0 0.0
    %367 = vmatprep.subr.mxu0 0.0
    %368 = vmatpush2.msra.mxu0 0.0
    %369 = vmatprep.subr.mxu0 0.0
    %370 = vmatpush2.msra.mxu0 0.0
    %371 = vmatprep.subr.mxu0 0.0
    %372 = vmatpush2.msra.mxu0 0.0
    %373 = vmatprep.subr.mxu0 0.0
    %374 = vmatpush2.msra.mxu0 0.0
    %375 = vmatprep.subr.mxu0 0.0
    %376 = vmatpush2.msra.mxu0 0.0
    %377 = vmatprep.subr.mxu0 0.0
    %378 = vmatpush2.msra.mxu0 0.0
    %379 = vmatprep.subr.mxu0 0.0
    %380 = vmatpush2.msra.mxu0 0.0
    %381 = vmatprep.subr.mxu0 0.0
    %382 = vmatpush2.msra.mxu0 0.0
    %383 = vmatprep.subr.mxu0 0.0
    %384 = vmatpush2.msra.mxu0 0.0
    %385 = vmatprep.subr.mxu0 0.0
    %386 = vmatpush2.msra.mxu0 0.0
    %387 = vmatprep.subr.mxu0 0.0
    %388 = vmatpush2.msra.mxu0 0.0
    %389 = vmatprep.subr.mxu0 0.0
    %390 = vmatpush2.msra.mxu0 0.0
    %391 = vmatprep.subr.mxu0 0.0
    %392 = vmatpush2.msra.mxu0 0.0
    %393 = vmatprep.subr.mxu0 0.0
    %394 = vmatpush2.msra.mxu0 0.0
    %395 = vmatprep.mubr.f32.mxu0 0.0
    %396 = vmatmul.mubr.f32.gmra.mxu0 %v144
    %v397 = vpop.f32.mrf.mxu0
    %v398 = vadd.f32 0.0, %v397
    %v399 = vpop.f32.mrf.mxu0
    %400 = vdwg.mxu0
    %402 = vset.pattern.permute.xlu0 0
    %403 = vperm.xlu0 %402, %v398
    %v404 = vpop.permute.xlu0 %403
    %v406 = vsub.f32 %v136, %v404
    %v407 = vsub.f32 %v137, %v404
    %v408 = vmul.f32 %v406, %v406
    %v409 = vmul.f32 %v407, %v407
    %v410 = vadd.f32 %v408, %v409
    %411 = vadd.xlane.f32.xlu0 %v410
    %v412 = vpop.xlane.xlu0 %411
    %413 = vmatprep.subr.mxu0 0.0
    %414 = vmatpush1.msra.mxu0 0.0
    %415 = vmatprep.subr.mxu0 0.0
    %416 = vmatpush1.msra.mxu0 0.0
    %417 = vmatprep.subr.mxu0 0.0
    %418 = vmatpush1.msra.mxu0 0.0
    %419 = vmatprep.subr.mxu0 0.0
    %420 = vmatpush1.msra.mxu0 0.0
    %421 = vmatprep.subr.mxu0 0.0
    %422 = vmatpush1.msra.mxu0 0.0
    %423 = vmatprep.subr.mxu0 0.0
    %424 = vmatpush1.msra.mxu0 0.0
    %425 = vmatprep.subr.mxu0 0.0
    %426 = vmatpush1.msra.mxu0 0.0
    %427 = vmatprep.subr.mxu0 0.0
    %428 = vmatpush1.msra.mxu0 0.0
    %429 = vmatprep.subr.mxu0 0.0
    %430 = vmatpush1.msra.mxu0 0.0
    %431 = vmatprep.subr.mxu0 0.0
    %432 = vmatpush1.msra.mxu0 0.0
    %433 = vmatprep.subr.mxu0 0.0
    %434 = vmatpush1.msra.mxu0 0.0
    %435 = vmatprep.subr.mxu0 0.0
    %436 = vmatpush1.msra.mxu0 0.0
    %437 = vmatprep.subr.mxu0 0.0
    %438 = vmatpush1.msra.mxu0 0.0
    %439 = vmatprep.subr.mxu0 0.0
    %440 = vmatpush1.msra.mxu0 0.0
    %441 = vmatprep.subr.mxu0 0.0
    %442 = vmatpush1.msra.mxu0 0.0
    %443 = vmatprep.subr.mxu0 0.0
    %444 = vmatpush1.msra.mxu0 %v412
    %445 = vmatprep.subr.mxu0 0.0
    %446 = vmatpush2.msra.mxu0 0.0
    %447 = vmatprep.subr.mxu0 0.0
    %448 = vmatpush2.msra.mxu0 0.0
    %449 = vmatprep.subr.mxu0 0.0
    %450 = vmatpush2.msra.mxu0 0.0
    %451 = vmatprep.subr.mxu0 0.0
    %452 = vmatpush2.msra.mxu0 0.0
    %453 = vmatprep.subr.mxu0 0.0
    %454 = vmatpush2.msra.mxu0 0.0
    %455 = vmatprep.subr.mxu0 0.0
    %456 = vmatpush2.msra.mxu0 0.0
    %457 = vmatprep.subr.mxu0 0.0
    %458 = vmatpush2.msra.mxu0 0.0
    %459 = vmatprep.subr.mxu0 0.0
    %460 = vmatpush2.msra.mxu0 0.0
    %461 = vmatprep.subr.mxu0 0.0
    %462 = vmatpush2.msra.mxu0 0.0
    %463 = vmatprep.subr.mxu0 0.0
    %464 = vmatpush2.msra.mxu0 0.0
    %465 = vmatprep.subr.mxu0 0.0
    %466 = vmatpush2.msra.mxu0 0.0
    %467 = vmatprep.subr.mxu0 0.0
    %468 = vmatpush2.msra.mxu0 0.0
    %469 = vmatprep.subr.mxu0 0.0
    %470 = vmatpush2.msra.mxu0 0.0
    %471 = vmatprep.subr.mxu0 0.0
    %472 = vmatpush2.msra.mxu0 0.0
    %473 = vmatprep.subr.mxu0 0.0
    %474 = vmatpush2.msra.mxu0 0.0
    %475 = vmatprep.subr.mxu0 0.0
    %476 = vmatpush2.msra.mxu0 0.0
    %477 = vmatprep.mubr.f32.mxu0 0.0
    %478 = vmatmul.mubr.f32.gmra.mxu0 %v144
    %v479 = vpop.f32.mrf.mxu0
    %v480 = vadd.f32 1e-05, %v479
    %v481 = vpop.f32.mrf.mxu0
    %482 = vdwg.mxu0
    %v483 = vrsqrt.pop %v480
    %v484 = vmul.f32 %v117, %v483
    %486 = vset.pattern.permute.xlu0 0
    %487 = vperm.xlu0 %486, %v484
    %v488 = vpop.permute.xlu0 %487
    %v490 = vmul.f32 %v406, %v488
    %v491 = vmul.f32 %v407, %v488
    %v492 = vadd.f32 %v490, %v310
    %v493 = vadd.f32 %v491, %v310
    %v494 = vxor.u32 %v492, 2147483648
    %v495 = vxor.u32 %v493, 2147483648
    %v496 = vmul.f32 %v494, 1.442695
    %v497 = vpow.pop %v496
    %v498 = vmul.f32 %v495, 1.442695
    %v499 = vpow.pop %v498
    %v500 = vadd.f32 %v497, 1.0
    %v501 = vadd.f32 %v499, 1.0
    %v502 = vrcp.pop %v500
    %v503 = vmul.f32 1.0, %v502
    %v504 = vrcp.pop %v501
    %v505 = vmul.f32 1.0, %v504
    %v506 = vmul.f32 %v492, %v503
    %v507 = vmul.f32 %v493, %v505
    %508 = vrot.lane.b32.xlu0 %v326, 17
    %v509 = vpop.permute.xlu0 %508
    %510 = vrot.lane.b32.xlu0 %v327, 17
    %v511 = vpop.permute.xlu0 %510
    %v512 = vlaneseq
    %v513 = vand.u32 %v512, 127
    %vm514 = vcmp.lt.s32.totalorder %v513, 17
    %v515 = vsel %vm514, %v509, %v511
    %v516 = vsel %vm514, %v511, %v509
    %v518 = vlaneseq
    %v519 = vshrl.u32 %v518, 7
    %v520 = vsub.s32 0, %v519
    %v521 = vrot.slane %v118, %v520
    %v522 = vlaneseq
    %v523 = vshrl.u32 %v522, 7
    %v524 = vsub.s32 1, %v523
    %v525 = vrot.slane %v118, %v524
    %v528 = vmul.f32 %v516, %v521
    %v529 = vmul.f32 %v515, %v525
    %530 = vrot.lane.b32.xlu0 %v326, 16
    %v531 = vpop.permute.xlu0 %530
    %532 = vrot.lane.b32.xlu0 %v327, 16
    %v533 = vpop.permute.xlu0 %532
    %vm534 = vcmp.lt.s32.totalorder %v513, 16
    %v535 = vsel %vm534, %v531, %v533
    %v536 = vsel %vm534, %v533, %v531
    %v538 = vlaneseq
    %v539 = vshrl.u32 %v538, 7
    %v540 = vsub.s32 0, %v539
    %v541 = vrot.slane %v120, %v540
    %v542 = vlaneseq
    %v543 = vshrl.u32 %v542, 7
    %v544 = vsub.s32 1, %v543
    %v545 = vrot.slane %v120, %v544
    %v548 = vmul.f32 %v536, %v541
    %v549 = vmul.f32 %v535, %v545
    %550 = vrot.lane.b32.xlu0 %v326, 15
    %v551 = vpop.permute.xlu0 %550
    %552 = vrot.lane.b32.xlu0 %v327, 15
    %v553 = vpop.permute.xlu0 %552
    %vm554 = vcmp.lt.s32.totalorder %v513, 15
    %v555 = vsel %vm554, %v551, %v553
    %v556 = vsel %vm554, %v553, %v551
    %v558 = vlaneseq
    %v559 = vshrl.u32 %v558, 7
    %v560 = vsub.s32 0, %v559
    %v561 = vrot.slane %v122, %v560
    %v562 = vlaneseq
    %v563 = vshrl.u32 %v562, 7
    %v564 = vsub.s32 1, %v563
    %v565 = vrot.slane %v122, %v564
    %v568 = vmul.f32 %v556, %v561
    %v569 = vmul.f32 %v555, %v565
    %570 = vrot.lane.b32.xlu0 %v326, 1
    %v571 = vpop.permute.xlu0 %570
    %572 = vrot.lane.b32.xlu0 %v327, 1
    %v573 = vpop.permute.xlu0 %572
    %vm574 = vcmp.lt.s32.totalorder %v513, 1
    %v575 = vsel %vm574, %v571, %v573
    %v576 = vsel %vm574, %v573, %v571
    %v578 = vlaneseq
    %v579 = vshrl.u32 %v578, 7
    %v580 = vsub.s32 0, %v579
    %v581 = vrot.slane %v124, %v580
    %v582 = vlaneseq
    %v583 = vshrl.u32 %v582, 7
    %v584 = vsub.s32 1, %v583
    %v585 = vrot.slane %v124, %v584
    %v588 = vmul.f32 %v576, %v581
    %v589 = vmul.f32 %v575, %v585
    %590 = vrot.lane.b32.xlu0 %v326, 127
    %v591 = vpop.permute.xlu0 %590
    %592 = vrot.lane.b32.xlu0 %v327, 127
    %v593 = vpop.permute.xlu0 %592
    %vm594 = vcmp.lt.s32.totalorder %v513, 127
    %v595 = vsel %vm594, %v591, %v593
    %v596 = vsel %vm594, %v593, %v591
    %v598 = vlaneseq
    %v599 = vshrl.u32 %v598, 7
    %v600 = vsub.s32 0, %v599
    %v601 = vrot.slane %v126, %v600
    %v602 = vlaneseq
    %v603 = vshrl.u32 %v602, 7
    %v604 = vsub.s32 1, %v603
    %v605 = vrot.slane %v126, %v604
    %v608 = vmul.f32 %v595, %v601
    %v609 = vmul.f32 %v596, %v605
    %610 = vrot.lane.b32.xlu0 %v326, 113
    %v611 = vpop.permute.xlu0 %610
    %612 = vrot.lane.b32.xlu0 %v327, 113
    %v613 = vpop.permute.xlu0 %612
    %vm614 = vcmp.lt.s32.totalorder %v513, 113
    %v615 = vsel %vm614, %v611, %v613
    %v616 = vsel %vm614, %v613, %v611
    %v618 = vlaneseq
    %v619 = vshrl.u32 %v618, 7
    %v620 = vsub.s32 0, %v619
    %v621 = vrot.slane %v128, %v620
    %v622 = vlaneseq
    %v623 = vshrl.u32 %v622, 7
    %v624 = vsub.s32 1, %v623
    %v625 = vrot.slane %v128, %v624
    %v628 = vmul.f32 %v615, %v621
    %v629 = vmul.f32 %v616, %v625
    %630 = vrot.lane.b32.xlu0 %v326, 112
    %v631 = vpop.permute.xlu0 %630
    %632 = vrot.lane.b32.xlu0 %v327, 112
    %v633 = vpop.permute.xlu0 %632
    %vm634 = vcmp.lt.s32.totalorder %v513, 112
    %v635 = vsel %vm634, %v631, %v633
    %v636 = vsel %vm634, %v633, %v631
    %v638 = vlaneseq
    %v639 = vshrl.u32 %v638, 7
    %v640 = vsub.s32 0, %v639
    %v641 = vrot.slane %v130, %v640
    %v642 = vlaneseq
    %v643 = vshrl.u32 %v642, 7
    %v644 = vsub.s32 1, %v643
    %v645 = vrot.slane %v130, %v644
    %v648 = vmul.f32 %v635, %v641
    %v649 = vmul.f32 %v636, %v645
    %650 = vrot.lane.b32.xlu0 %v326, 111
    %v651 = vpop.permute.xlu0 %650
    %652 = vrot.lane.b32.xlu0 %v327, 111
    %v653 = vpop.permute.xlu0 %652
    %vm654 = vcmp.lt.s32.totalorder %v513, 111
    %v655 = vsel %vm654, %v651, %v653
    %v656 = vsel %vm654, %v653, %v651
    %v658 = vlaneseq
    %v659 = vshrl.u32 %v658, 7
    %v660 = vsub.s32 0, %v659
    %v661 = vrot.slane %v132, %v660
    %v662 = vlaneseq
    %v663 = vshrl.u32 %v662, 7
    %v664 = vsub.s32 1, %v663
    %v665 = vrot.slane %v132, %v664
    %v668 = vmul.f32 %v655, %v661
    %v669 = vmul.f32 %v656, %v665
    %670 = vrot.lane.b32.xlu0 %v506, 17
    %v671 = vpop.permute.xlu0 %670
    %672 = vrot.lane.b32.xlu0 %v507, 17
    %v673 = vpop.permute.xlu0 %672
    %v674 = vsel %vm514, %v671, %v673
    %v675 = vsel %vm514, %v673, %v671
    %v676 = vmul.f32 %v675, %v521
    %v677 = vmul.f32 %v674, %v525
    %678 = vrot.lane.b32.xlu0 %v506, 16
    %v679 = vpop.permute.xlu0 %678
    %680 = vrot.lane.b32.xlu0 %v507, 16
    %v681 = vpop.permute.xlu0 %680
    %v682 = vsel %vm534, %v679, %v681
    %v683 = vsel %vm534, %v681, %v679
    %v684 = vmul.f32 %v683, %v541
    %v685 = vmul.f32 %v682, %v545
    %686 = vrot.lane.b32.xlu0 %v506, 15
    %v687 = vpop.permute.xlu0 %686
    %688 = vrot.lane.b32.xlu0 %v507, 15
    %v689 = vpop.permute.xlu0 %688
    %v690 = vsel %vm554, %v687, %v689
    %v691 = vsel %vm554, %v689, %v687
    %v692 = vmul.f32 %v691, %v561
    %v693 = vmul.f32 %v690, %v565
    %694 = vrot.lane.b32.xlu0 %v506, 1
    %v695 = vpop.permute.xlu0 %694
    %696 = vrot.lane.b32.xlu0 %v507, 1
    %v697 = vpop.permute.xlu0 %696
    %v698 = vsel %vm574, %v695, %v697
    %v699 = vsel %vm574, %v697, %v695
    %v700 = vmul.f32 %v699, %v581
    %v701 = vmul.f32 %v698, %v585
    %702 = vrot.lane.b32.xlu0 %v506, 127
    %v703 = vpop.permute.xlu0 %702
    %704 = vrot.lane.b32.xlu0 %v507, 127
    %v705 = vpop.permute.xlu0 %704
    %v706 = vsel %vm594, %v703, %v705
    %v707 = vsel %vm594, %v705, %v703
    %v708 = vmul.f32 %v706, %v601
    %v709 = vmul.f32 %v707, %v605
    %710 = vrot.lane.b32.xlu0 %v506, 113
    %v711 = vpop.permute.xlu0 %710
    %712 = vrot.lane.b32.xlu0 %v507, 113
    %v713 = vpop.permute.xlu0 %712
    %v714 = vsel %vm614, %v711, %v713
    %v715 = vsel %vm614, %v713, %v711
    %v716 = vmul.f32 %v714, %v621
    %v717 = vmul.f32 %v715, %v625
    %718 = vrot.lane.b32.xlu0 %v506, 112
    %v719 = vpop.permute.xlu0 %718
    %720 = vrot.lane.b32.xlu0 %v507, 112
    %v721 = vpop.permute.xlu0 %720
    %v722 = vsel %vm634, %v719, %v721
    %v723 = vsel %vm634, %v721, %v719
    %v724 = vmul.f32 %v722, %v641
    %v725 = vmul.f32 %v723, %v645
    %726 = vrot.lane.b32.xlu0 %v506, 111
    %v727 = vpop.permute.xlu0 %726
    %728 = vrot.lane.b32.xlu0 %v507, 111
    %v729 = vpop.permute.xlu0 %728
    %v730 = vsel %vm654, %v727, %v729
    %v731 = vsel %vm654, %v729, %v727
    %v732 = vmul.f32 %v730, %v661
    %v733 = vmul.f32 %v731, %v665
    %v734 = vld [vmem:[#allocation10] sm:$0xf]
    %v735 = vpack.c.bf16 %v548, %v528
    %v736 = vpack.c.bf16 %v549, %v529
    %v737 = vpack.c.bf16 %v684, %v676
    %v738 = vpack.c.bf16 %v685, %v677
    %v739 = vpack.c.bf16 %v588, %v568
    %v740 = vpack.c.bf16 %v589, %v569
    %v741 = vpack.c.bf16 %v700, %v692
    %v742 = vpack.c.bf16 %v701, %v693
    %v743 = vpack.c.bf16 %v608, %v326
    %v744 = vpack.c.bf16 %v609, %v327
    %v745 = vpack.c.bf16 %v708, %v506
    %v746 = vpack.c.bf16 %v709, %v507
    %v747 = vpack.c.bf16 %v648, %v628
    %v748 = vpack.c.bf16 %v649, %v629
    %v749 = vpack.c.bf16 %v724, %v716
    %v750 = vpack.c.bf16 %v725, %v717
    %v751 = vpack.c.bf16 %v668, %v668
    %v752 = vpack.c.bf16 %v669, %v669
    %v753 = vpack.c.bf16 %v732, %v732
    %v754 = vpack.c.bf16 %v733, %v733
    %vm755 = vcmask 588800
    %v757 = vsel %vm755, %v734, 0
    %vm759 = vcmask 1043456
    %v761 = vsel %vm759, %v751, 0
    %v764 = vsel %vm759, %v752, 0
    %v767 = vsel %vm759, %v753, 0
    %v770 = vsel %vm759, %v754, 0
    %772 = vmatprep.subr.bf16.mxu0 0
    %773 = vmatpush1.bf16.msra.mxu0 0
    %774 = vmatprep.subr.bf16.mxu0 0
    %775 = vmatpush1.bf16.msra.mxu0 0
    %776 = vmatprep.subr.bf16.mxu0 0
    %777 = vmatpush1.bf16.msra.mxu0 0
    %778 = vmatprep.subr.bf16.mxu0 %v764
    %779 = vmatpush1.bf16.msra.mxu0 %v761
    %780 = vmatprep.subr.bf16.mxu0 %v748
    %781 = vmatpush1.bf16.msra.mxu0 %v747
    %782 = vmatprep.subr.bf16.mxu0 %v744
    %783 = vmatpush1.bf16.msra.mxu0 %v743
    %784 = vmatprep.subr.bf16.mxu0 %v740
    %785 = vmatpush1.bf16.msra.mxu0 %v739
    %786 = vmatprep.subr.bf16.mxu0 %v736
    %787 = vmatpush1.bf16.msra.mxu0 %v735
    %788 = vmatprep.subr.bf16.mxu0 0
    %789 = vmatpush2.bf16.msra.mxu0 0
    %790 = vmatprep.subr.bf16.mxu0 0
    %791 = vmatpush2.bf16.msra.mxu0 0
    %792 = vmatprep.subr.bf16.mxu0 0
    %793 = vmatpush2.bf16.msra.mxu0 0
    %794 = vmatprep.subr.bf16.mxu0 0
    %795 = vmatpush2.bf16.msra.mxu0 0
    %796 = vmatprep.subr.bf16.mxu0 0
    %797 = vmatpush2.bf16.msra.mxu0 0
    %798 = vmatprep.subr.bf16.mxu0 0
    %799 = vmatpush2.bf16.msra.mxu0 0
    %800 = vmatprep.subr.bf16.mxu0 0
    %801 = vmatpush2.bf16.msra.mxu0 0
    %802 = vmatprep.subr.bf16.mxu0 0
    %803 = vmatpush2.bf16.msra.mxu0 0
    %804 = vmatprep.mubr.bf16.mxu0 0
    %805 = vmatmul.mubr.bf16.gmra.mxu0 %v757
    %v806 = vpop.f32.mrf.mxu0
    %v807 = vadd.f32 0.0, %v806
    %v808 = vpop.f32.mrf.mxu0
    %v809 = vadd.f32 0.0, %v808
    %v810 = vpop.f32.mrf.mxu0
    %v811 = vpop.f32.mrf.mxu0
    %812 = vdwg.mxu0
    %813 = vmatprep.subr.bf16.mxu0 0
    %814 = vmatpush1.bf16.msra.mxu0 0
    %815 = vmatprep.subr.bf16.mxu0 0
    %816 = vmatpush1.bf16.msra.mxu0 0
    %817 = vmatprep.subr.bf16.mxu0 0
    %818 = vmatpush1.bf16.msra.mxu0 0
    %819 = vmatprep.subr.bf16.mxu0 %v770
    %820 = vmatpush1.bf16.msra.mxu0 %v767
    %821 = vmatprep.subr.bf16.mxu0 %v750
    %822 = vmatpush1.bf16.msra.mxu0 %v749
    %823 = vmatprep.subr.bf16.mxu0 %v746
    %824 = vmatpush1.bf16.msra.mxu0 %v745
    %825 = vmatprep.subr.bf16.mxu0 %v742
    %826 = vmatpush1.bf16.msra.mxu0 %v741
    %827 = vmatprep.subr.bf16.mxu0 %v738
    %828 = vmatpush1.bf16.msra.mxu0 %v737
    %829 = vmatprep.subr.bf16.mxu0 0
    %830 = vmatpush2.bf16.msra.mxu0 0
    %831 = vmatprep.subr.bf16.mxu0 0
    %832 = vmatpush2.bf16.msra.mxu0 0
    %833 = vmatprep.subr.bf16.mxu0 0
    %834 = vmatpush2.bf16.msra.mxu0 0
    %835 = vmatprep.subr.bf16.mxu0 0
    %836 = vmatpush2.bf16.msra.mxu0 0
    %837 = vmatprep.subr.bf16.mxu0 0
    %838 = vmatpush2.bf16.msra.mxu0 0
    %839 = vmatprep.subr.bf16.mxu0 0
    %840 = vmatpush2.bf16.msra.mxu0 0
    %841 = vmatprep.subr.bf16.mxu0 0
    %842 = vmatpush2.bf16.msra.mxu0 0
    %843 = vmatprep.subr.bf16.mxu0 0
    %844 = vmatpush2.bf16.msra.mxu0 0
    %845 = vmatprep.mubr.bf16.mxu0 0
    %846 = vmatmul.mubr.bf16.gmra.mxu0 %v757
    %v847 = vpop.f32.mrf.mxu0
    %v848 = vadd.f32 0.0, %v847
    %v849 = vpop.f32.mrf.mxu0
    %v850 = vadd.f32 0.0, %v849
    %v851 = vpop.f32.mrf.mxu0
    %v852 = vpop.f32.mrf.mxu0
    %853 = vdwg.mxu0
    %854 = vset.pattern.permute.xlu0 4
    %855 = vperm.xlu0 %854, %v117
    %v856 = vpop.permute.xlu0 %855
    %v858 = vadd.f32 %v807, %v856
    %v859 = vadd.f32 %v809, %v856
    %v860 = vadd.f32 %v848, %v856
    %v861 = vadd.f32 %v850, %v856
    %v862 = vld [vmem:[%s1] sm:$0xff]
    %s863 = scalar_lea.vmem %s1, 8
    %v864 = vld [vmem:[%s863] sm:$0xff]
    %v865 = vadd.f32 %v862, 1.0
    %867 = vset.pattern.permute.xlu0 0
    %868 = vperm.xlu0 %867, %v865
    %v869 = vpop.permute.xlu0 %868
    %v871 = vmul.f32 %v858, %v869
    %v872 = vmul.f32 %v859, %v869
    %874 = vset.pattern.permute.xlu0 1
    %875 = vperm.xlu0 %874, %v862
    %v876 = vpop.permute.xlu0 %875
    %v878 = vadd.f32 %v871, %v876
    %v879 = vadd.f32 %v872, %v876
    %v880 = vadd.f32 %v864, 1.0
    %882 = vset.pattern.permute.xlu0 0
    %883 = vperm.xlu0 %882, %v880
    %v884 = vpop.permute.xlu0 %883
    %v886 = vmul.f32 %v860, %v884
    %v887 = vmul.f32 %v861, %v884
    %889 = vset.pattern.permute.xlu0 1
    %890 = vperm.xlu0 %889, %v864
    %v891 = vpop.permute.xlu0 %890
    %v893 = vadd.f32 %v886, %v891
    %v894 = vadd.f32 %v887, %v891
    %v895 = vadd.f32 %v878, %v879
    %896 = vadd.xlane.f32.xlu0 %v895
    %v897 = vpop.xlane.xlu0 %896
    %v898 = vld [vmem:[#allocation8] sm:$0xff]
    %v900 = vsel %vm142, %v898, 0
    %902 = vmatprep.subr.mxu0 0.0
    %903 = vmatpush1.msra.mxu0 0.0
    %904 = vmatprep.subr.mxu0 0.0
    %905 = vmatpush1.msra.mxu0 0.0
    %906 = vmatprep.subr.mxu0 0.0
    %907 = vmatpush1.msra.mxu0 0.0
    %908 = vmatprep.subr.mxu0 0.0
    %909 = vmatpush1.msra.mxu0 0.0
    %910 = vmatprep.subr.mxu0 0.0
    %911 = vmatpush1.msra.mxu0 0.0
    %912 = vmatprep.subr.mxu0 0.0
    %913 = vmatpush1.msra.mxu0 0.0
    %914 = vmatprep.subr.mxu0 0.0
    %915 = vmatpush1.msra.mxu0 0.0
    %916 = vmatprep.subr.mxu0 0.0
    %917 = vmatpush1.msra.mxu0 0.0
    %918 = vmatprep.subr.mxu0 0.0
    %919 = vmatpush1.msra.mxu0 0.0
    %920 = vmatprep.subr.mxu0 0.0
    %921 = vmatpush1.msra.mxu0 0.0
    %922 = vmatprep.subr.mxu0 0.0
    %923 = vmatpush1.msra.mxu0 0.0
    %924 = vmatprep.subr.mxu0 0.0
    %925 = vmatpush1.msra.mxu0 0.0
    %926 = vmatprep.subr.mxu0 0.0
    %927 = vmatpush1.msra.mxu0 0.0
    %928 = vmatprep.subr.mxu0 0.0
    %929 = vmatpush1.msra.mxu0 0.0
    %930 = vmatprep.subr.mxu0 0.0
    %931 = vmatpush1.msra.mxu0 0.0
    %932 = vmatprep.subr.mxu0 0.0
    %933 = vmatpush1.msra.mxu0 %v897
    %934 = vmatprep.subr.mxu0 0.0
    %935 = vmatpush2.msra.mxu0 0.0
    %936 = vmatprep.subr.mxu0 0.0
    %937 = vmatpush2.msra.mxu0 0.0
    %938 = vmatprep.subr.mxu0 0.0
    %939 = vmatpush2.msra.mxu0 0.0
    %940 = vmatprep.subr.mxu0 0.0
    %941 = vmatpush2.msra.mxu0 0.0
    %942 = vmatprep.subr.mxu0 0.0
    %943 = vmatpush2.msra.mxu0 0.0
    %944 = vmatprep.subr.mxu0 0.0
    %945 = vmatpush2.msra.mxu0 0.0
    %946 = vmatprep.subr.mxu0 0.0
    %947 = vmatpush2.msra.mxu0 0.0
    %948 = vmatprep.subr.mxu0 0.0
    %949 = vmatpush2.msra.mxu0 0.0
    %950 = vmatprep.subr.mxu0 0.0
    %951 = vmatpush2.msra.mxu0 0.0
    %952 = vmatprep.subr.mxu0 0.0
    %953 = vmatpush2.msra.mxu0 0.0
    %954 = vmatprep.subr.mxu0 0.0
    %955 = vmatpush2.msra.mxu0 0.0
    %956 = vmatprep.subr.mxu0 0.0
    %957 = vmatpush2.msra.mxu0 0.0
    %958 = vmatprep.subr.mxu0 0.0
    %959 = vmatpush2.msra.mxu0 0.0
    %960 = vmatprep.subr.mxu0 0.0
    %961 = vmatpush2.msra.mxu0 0.0
    %962 = vmatprep.subr.mxu0 0.0
    %963 = vmatpush2.msra.mxu0 0.0
    %964 = vmatprep.subr.mxu0 0.0
    %965 = vmatpush2.msra.mxu0 0.0
    %966 = vmatprep.mubr.f32.mxu0 0.0
    %967 = vmatmul.mubr.f32.gmra.mxu0 %v900
    %v968 = vpop.f32.mrf.mxu0
    %v969 = vadd.f32 0.0, %v968
    %v970 = vpop.f32.mrf.mxu0
    %971 = vdwg.mxu0
    %973 = vset.pattern.permute.xlu0 0
    %974 = vperm.xlu0 %973, %v969
    %v975 = vpop.permute.xlu0 %974
    %v977 = vsub.f32 %v878, %v975
    %v978 = vsub.f32 %v879, %v975
    %v979 = vmul.f32 %v977, %v977
    %v980 = vmul.f32 %v978, %v978
    %v981 = vadd.f32 %v979, %v980
    %982 = vadd.xlane.f32.xlu0 %v981
    %v983 = vpop.xlane.xlu0 %982
    %984 = vmatprep.subr.mxu0 0.0
    %985 = vmatpush1.msra.mxu0 0.0
    %986 = vmatprep.subr.mxu0 0.0
    %987 = vmatpush1.msra.mxu0 0.0
    %988 = vmatprep.subr.mxu0 0.0
    %989 = vmatpush1.msra.mxu0 0.0
    %990 = vmatprep.subr.mxu0 0.0
    %991 = vmatpush1.msra.mxu0 0.0
    %992 = vmatprep.subr.mxu0 0.0
    %993 = vmatpush1.msra.mxu0 0.0
    %994 = vmatprep.subr.mxu0 0.0
    %995 = vmatpush1.msra.mxu0 0.0
    %996 = vmatprep.subr.mxu0 0.0
    %997 = vmatpush1.msra.mxu0 0.0
    %998 = vmatprep.subr.mxu0 0.0
    %999 = vmatpush1.msra.mxu0 0.0
    %1000 = vmatprep.subr.mxu0 0.0
    %1001 = vmatpush1.msra.mxu0 0.0
    %1002 = vmatprep.subr.mxu0 0.0
    %1003 = vmatpush1.msra.mxu0 0.0
    %1004 = vmatprep.subr.mxu0 0.0
    %1005 = vmatpush1.msra.mxu0 0.0
    %1006 = vmatprep.subr.mxu0 0.0
    %1007 = vmatpush1.msra.mxu0 0.0
    %1008 = vmatprep.subr.mxu0 0.0
    %1009 = vmatpush1.msra.mxu0 0.0
    %1010 = vmatprep.subr.mxu0 0.0
    %1011 = vmatpush1.msra.mxu0 0.0
    %1012 = vmatprep.subr.mxu0 0.0
    %1013 = vmatpush1.msra.mxu0 0.0
    %1014 = vmatprep.subr.mxu0 0.0
    %1015 = vmatpush1.msra.mxu0 %v983
    %1016 = vmatprep.subr.mxu0 0.0
    %1017 = vmatpush2.msra.mxu0 0.0
    %1018 = vmatprep.subr.mxu0 0.0
    %1019 = vmatpush2.msra.mxu0 0.0
    %1020 = vmatprep.subr.mxu0 0.0
    %1021 = vmatpush2.msra.mxu0 0.0
    %1022 = vmatprep.subr.mxu0 0.0
    %1023 = vmatpush2.msra.mxu0 0.0
    %1024 = vmatprep.subr.mxu0 0.0
    %1025 = vmatpush2.msra.mxu0 0.0
    %1026 = vmatprep.subr.mxu0 0.0
    %1027 = vmatpush2.msra.mxu0 0.0
    %1028 = vmatprep.subr.mxu0 0.0
    %1029 = vmatpush2.msra.mxu0 0.0
    %1030 = vmatprep.subr.mxu0 0.0
    %1031 = vmatpush2.msra.mxu0 0.0
    %1032 = vmatprep.subr.mxu0 0.0
    %1033 = vmatpush2.msra.mxu0 0.0
    %1034 = vmatprep.subr.mxu0 0.0
    %1035 = vmatpush2.msra.mxu0 0.0
    %1036 = vmatprep.subr.mxu0 0.0
    %1037 = vmatpush2.msra.mxu0 0.0
    %1038 = vmatprep.subr.mxu0 0.0
    %1039 = vmatpush2.msra.mxu0 0.0
    %1040 = vmatprep.subr.mxu0 0.0
    %1041 = vmatpush2.msra.mxu0 0.0
    %1042 = vmatprep.subr.mxu0 0.0
    %1043 = vmatpush2.msra.mxu0 0.0
    %1044 = vmatprep.subr.mxu0 0.0
    %1045 = vmatpush2.msra.mxu0 0.0
    %1046 = vmatprep.subr.mxu0 0.0
    %1047 = vmatpush2.msra.mxu0 0.0
    %1048 = vmatprep.mubr.f32.mxu0 0.0
    %1049 = vmatmul.mubr.f32.gmra.mxu0 %v900
    %v1050 = vpop.f32.mrf.mxu0
    %v1051 = vadd.f32 1e-05, %v1050
    %v1052 = vpop.f32.mrf.mxu0
    %1053 = vdwg.mxu0
    %v1054 = vrsqrt.pop %v1051
    %1056 = vrot.lane.b32.xlu0 %v1054, 2
    %v1057 = vpop.permute.xlu0 %1056
    %v1059 = vmul.f32 %v117, %v1057
    %1061 = vset.pattern.permute.xlu0 2
    %1062 = vperm.xlu0 %1061, %v1059
    %v1063 = vpop.permute.xlu0 %1062
    %v1065 = vmul.f32 %v977, %v1063
    %v1066 = vmul.f32 %v978, %v1063
    %1067 = vset.pattern.permute.xlu0 3
    %1068 = vperm.xlu0 %1067, %v117
    %v1069 = vpop.permute.xlu0 %1068
    %v1071 = vadd.f32 %v1065, %v1069
    %v1072 = vadd.f32 %v1066, %v1069
    %v1073 = vxor.u32 %v1071, 2147483648
    %v1074 = vxor.u32 %v1072, 2147483648
    %v1075 = vmul.f32 %v1073, 1.442695
    %v1076 = vpow.pop %v1075
    %v1077 = vmul.f32 %v1074, 1.442695
    %v1078 = vpow.pop %v1077
    %v1079 = vadd.f32 %v1076, 1.0
    %v1080 = vadd.f32 %v1078, 1.0
    %v1081 = vrcp.pop %v1079
    %v1082 = vmul.f32 1.0, %v1081
    %v1083 = vrcp.pop %v1080
    %v1084 = vmul.f32 1.0, %v1083
    %v1085 = vmul.f32 %v1071, %v1082
    %v1086 = vmul.f32 %v1072, %v1084
    %v1087 = vadd.f32 %v893, %v894
    %1088 = vadd.xlane.f32.xlu0 %v1087
    %v1089 = vpop.xlane.xlu0 %1088
    %1090 = vmatprep.subr.mxu0 0.0
    %1091 = vmatpush1.msra.mxu0 0.0
    %1092 = vmatprep.subr.mxu0 0.0
    %1093 = vmatpush1.msra.mxu0 0.0
    %1094 = vmatprep.subr.mxu0 0.0
    %1095 = vmatpush1.msra.mxu0 0.0
    %1096 = vmatprep.subr.mxu0 0.0
    %1097 = vmatpush1.msra.mxu0 0.0
    %1098 = vmatprep.subr.mxu0 0.0
    %1099 = vmatpush1.msra.mxu0 0.0
    %1100 = vmatprep.subr.mxu0 0.0
    %1101 = vmatpush1.msra.mxu0 0.0
    %1102 = vmatprep.subr.mxu0 0.0
    %1103 = vmatpush1.msra.mxu0 0.0
    %1104 = vmatprep.subr.mxu0 0.0
    %1105 = vmatpush1.msra.mxu0 0.0
    %1106 = vmatprep.subr.mxu0 0.0
    %1107 = vmatpush1.msra.mxu0 0.0
    %1108 = vmatprep.subr.mxu0 0.0
    %1109 = vmatpush1.msra.mxu0 0.0
    %1110 = vmatprep.subr.mxu0 0.0
    %1111 = vmatpush1.msra.mxu0 0.0
    %1112 = vmatprep.subr.mxu0 0.0
    %1113 = vmatpush1.msra.mxu0 0.0
    %1114 = vmatprep.subr.mxu0 0.0
    %1115 = vmatpush1.msra.mxu0 0.0
    %1116 = vmatprep.subr.mxu0 0.0
    %1117 = vmatpush1.msra.mxu0 0.0
    %1118 = vmatprep.subr.mxu0 0.0
    %1119 = vmatpush1.msra.mxu0 0.0
    %1120 = vmatprep.subr.mxu0 0.0
    %1121 = vmatpush1.msra.mxu0 %v1089
    %1122 = vmatprep.subr.mxu0 0.0
    %1123 = vmatpush2.msra.mxu0 0.0
    %1124 = vmatprep.subr.mxu0 0.0
    %1125 = vmatpush2.msra.mxu0 0.0
    %1126 = vmatprep.subr.mxu0 0.0
    %1127 = vmatpush2.msra.mxu0 0.0
    %1128 = vmatprep.subr.mxu0 0.0
    %1129 = vmatpush2.msra.mxu0 0.0
    %1130 = vmatprep.subr.mxu0 0.0
    %1131 = vmatpush2.msra.mxu0 0.0
    %1132 = vmatprep.subr.mxu0 0.0
    %1133 = vmatpush2.msra.mxu0 0.0
    %1134 = vmatprep.subr.mxu0 0.0
    %1135 = vmatpush2.msra.mxu0 0.0
    %1136 = vmatprep.subr.mxu0 0.0
    %1137 = vmatpush2.msra.mxu0 0.0
    %1138 = vmatprep.subr.mxu0 0.0
    %1139 = vmatpush2.msra.mxu0 0.0
    %1140 = vmatprep.subr.mxu0 0.0
    %1141 = vmatpush2.msra.mxu0 0.0
    %1142 = vmatprep.subr.mxu0 0.0
    %1143 = vmatpush2.msra.mxu0 0.0
    %1144 = vmatprep.subr.mxu0 0.0
    %1145 = vmatpush2.msra.mxu0 0.0
    %1146 = vmatprep.subr.mxu0 0.0
    %1147 = vmatpush2.msra.mxu0 0.0
    %1148 = vmatprep.subr.mxu0 0.0
    %1149 = vmatpush2.msra.mxu0 0.0
    %1150 = vmatprep.subr.mxu0 0.0
    %1151 = vmatpush2.msra.mxu0 0.0
    %1152 = vmatprep.subr.mxu0 0.0
    %1153 = vmatpush2.msra.mxu0 0.0
    %1154 = vmatprep.mubr.f32.mxu0 0.0
    %1155 = vmatmul.mubr.f32.gmra.mxu0 %v900
    %v1156 = vpop.f32.mrf.mxu0
    %v1157 = vadd.f32 0.0, %v1156
    %v1158 = vpop.f32.mrf.mxu0
    %1159 = vdwg.mxu0
    %1161 = vset.pattern.permute.xlu0 0
    %1162 = vperm.xlu0 %1161, %v1157
    %v1163 = vpop.permute.xlu0 %1162
    %v1165 = vsub.f32 %v893, %v1163
    %v1166 = vsub.f32 %v894, %v1163
    %v1167 = vmul.f32 %v1165, %v1165
    %v1168 = vmul.f32 %v1166, %v1166
    %v1169 = vadd.f32 %v1167, %v1168
    %1170 = vadd.xlane.f32.xlu0 %v1169
    %v1171 = vpop.xlane.xlu0 %1170
    %1172 = vmatprep.subr.mxu0 0.0
    %1173 = vmatpush1.msra.mxu0 0.0
    %1174 = vmatprep.subr.mxu0 0.0
    %1175 = vmatpush1.msra.mxu0 0.0
    %1176 = vmatprep.subr.mxu0 0.0
    %1177 = vmatpush1.msra.mxu0 0.0
    %1178 = vmatprep.subr.mxu0 0.0
    %1179 = vmatpush1.msra.mxu0 0.0
    %1180 = vmatprep.subr.mxu0 0.0
    %1181 = vmatpush1.msra.mxu0 0.0
    %1182 = vmatprep.subr.mxu0 0.0
    %1183 = vmatpush1.msra.mxu0 0.0
    %1184 = vmatprep.subr.mxu0 0.0
    %1185 = vmatpush1.msra.mxu0 0.0
    %1186 = vmatprep.subr.mxu0 0.0
    %1187 = vmatpush1.msra.mxu0 0.0
    %1188 = vmatprep.subr.mxu0 0.0
    %1189 = vmatpush1.msra.mxu0 0.0
    %1190 = vmatprep.subr.mxu0 0.0
    %1191 = vmatpush1.msra.mxu0 0.0
    %1192 = vmatprep.subr.mxu0 0.0
    %1193 = vmatpush1.msra.mxu0 0.0
    %1194 = vmatprep.subr.mxu0 0.0
    %1195 = vmatpush1.msra.mxu0 0.0
    %1196 = vmatprep.subr.mxu0 0.0
    %1197 = vmatpush1.msra.mxu0 0.0
    %1198 = vmatprep.subr.mxu0 0.0
    %1199 = vmatpush1.msra.mxu0 0.0
    %1200 = vmatprep.subr.mxu0 0.0
    %1201 = vmatpush1.msra.mxu0 0.0
    %1202 = vmatprep.subr.mxu0 0.0
    %1203 = vmatpush1.msra.mxu0 %v1171
    %1204 = vmatprep.subr.mxu0 0.0
    %1205 = vmatpush2.msra.mxu0 0.0
    %1206 = vmatprep.subr.mxu0 0.0
    %1207 = vmatpush2.msra.mxu0 0.0
    %1208 = vmatprep.subr.mxu0 0.0
    %1209 = vmatpush2.msra.mxu0 0.0
    %1210 = vmatprep.subr.mxu0 0.0
    %1211 = vmatpush2.msra.mxu0 0.0
    %1212 = vmatprep.subr.mxu0 0.0
    %1213 = vmatpush2.msra.mxu0 0.0
    %1214 = vmatprep.subr.mxu0 0.0
    %1215 = vmatpush2.msra.mxu0 0.0
    %1216 = vmatprep.subr.mxu0 0.0
    %1217 = vmatpush2.msra.mxu0 0.0
    %1218 = vmatprep.subr.mxu0 0.0
    %1219 = vmatpush2.msra.mxu0 0.0
    %1220 = vmatprep.subr.mxu0 0.0
    %1221 = vmatpush2.msra.mxu0 0.0
    %1222 = vmatprep.subr.mxu0 0.0
    %1223 = vmatpush2.msra.mxu0 0.0
    %1224 = vmatprep.subr.mxu0 0.0
    %1225 = vmatpush2.msra.mxu0 0.0
    %1226 = vmatprep.subr.mxu0 0.0
    %1227 = vmatpush2.msra.mxu0 0.0
    %1228 = vmatprep.subr.mxu0 0.0
    %1229 = vmatpush2.msra.mxu0 0.0
    %1230 = vmatprep.subr.mxu0 0.0
    %1231 = vmatpush2.msra.mxu0 0.0
    %1232 = vmatprep.subr.mxu0 0.0
    %1233 = vmatpush2.msra.mxu0 0.0
    %1234 = vmatprep.subr.mxu0 0.0
    %1235 = vmatpush2.msra.mxu0 0.0
    %1236 = vmatprep.mubr.f32.mxu0 0.0
    %1237 = vmatmul.mubr.f32.gmra.mxu0 %v900
    %v1238 = vpop.f32.mrf.mxu0
    %v1239 = vadd.f32 1e-05, %v1238
    %v1240 = vpop.f32.mrf.mxu0
    %1241 = vdwg.mxu0
    %v1242 = vrsqrt.pop %v1239
    %1244 = vrot.lane.b32.xlu0 %v1242, 2
    %v1245 = vpop.permute.xlu0 %1244
    %v1247 = vmul.f32 %v117, %v1245
    %1249 = vset.pattern.permute.xlu0 2
    %1250 = vperm.xlu0 %1249, %v1247
    %v1251 = vpop.permute.xlu0 %1250
    %v1253 = vmul.f32 %v1165, %v1251
    %v1254 = vmul.f32 %v1166, %v1251
    %v1255 = vadd.f32 %v1253, %v1069
    %v1256 = vadd.f32 %v1254, %v1069
    %v1257 = vxor.u32 %v1255, 2147483648
    %v1258 = vxor.u32 %v1256, 2147483648
    %v1259 = vmul.f32 %v1257, 1.442695
    %v1260 = vpow.pop %v1259
    %v1261 = vmul.f32 %v1258, 1.442695
    %v1262 = vpow.pop %v1261
    %v1263 = vadd.f32 %v1260, 1.0
    %v1264 = vadd.f32 %v1262, 1.0
    %v1265 = vrcp.pop %v1263
    %v1266 = vmul.f32 1.0, %v1265
    %v1267 = vrcp.pop %v1264
    %v1268 = vmul.f32 1.0, %v1267
    %v1269 = vmul.f32 %v1255, %v1266
    %v1270 = vmul.f32 %v1256, %v1268
    %1271 = vrot.lane.b32.xlu0 %v1085, 17
    %v1272 = vpop.permute.xlu0 %1271
    %1273 = vrot.lane.b32.xlu0 %v1086, 17
    %v1274 = vpop.permute.xlu0 %1273
    %v1275 = vsel %vm514, %v1272, %v1274
    %v1276 = vsel %vm514, %v1274, %v1272
    %v1277 = vmul.f32 %v1276, %v521
    %v1278 = vmul.f32 %v1275, %v525
    %1279 = vrot.lane.b32.xlu0 %v1085, 16
    %v1280 = vpop.permute.xlu0 %1279
    %1281 = vrot.lane.b32.xlu0 %v1086, 16
    %v1282 = vpop.permute.xlu0 %1281
    %v1283 = vsel %vm534, %v1280, %v1282
    %v1284 = vsel %vm534, %v1282, %v1280
    %v1285 = vmul.f32 %v1284, %v541
    %v1286 = vmul.f32 %v1283, %v545
    %1287 = vrot.lane.b32.xlu0 %v1085, 15
    %v1288 = vpop.permute.xlu0 %1287
    %1289 = vrot.lane.b32.xlu0 %v1086, 15
    %v1290 = vpop.permute.xlu0 %1289
    %v1291 = vsel %vm554, %v1288, %v1290
    %v1292 = vsel %vm554, %v1290, %v1288
    %v1293 = vmul.f32 %v1292, %v561
    %v1294 = vmul.f32 %v1291, %v565
    %1295 = vrot.lane.b32.xlu0 %v1085, 1
    %v1296 = vpop.permute.xlu0 %1295
    %1297 = vrot.lane.b32.xlu0 %v1086, 1
    %v1298 = vpop.permute.xlu0 %1297
    %v1299 = vsel %vm574, %v1296, %v1298
    %v1300 = vsel %vm574, %v1298, %v1296
    %v1301 = vmul.f32 %v1300, %v581
    %v1302 = vmul.f32 %v1299, %v585
    %1303 = vrot.lane.b32.xlu0 %v1085, 127
    %v1304 = vpop.permute.xlu0 %1303
    %1305 = vrot.lane.b32.xlu0 %v1086, 127
    %v1306 = vpop.permute.xlu0 %1305
    %v1307 = vsel %vm594, %v1304, %v1306
    %v1308 = vsel %vm594, %v1306, %v1304
    %v1309 = vmul.f32 %v1307, %v601
    %v1310 = vmul.f32 %v1308, %v605
    %1311 = vrot.lane.b32.xlu0 %v1085, 113
    %v1312 = vpop.permute.xlu0 %1311
    %1313 = vrot.lane.b32.xlu0 %v1086, 113
    %v1314 = vpop.permute.xlu0 %1313
    %v1315 = vsel %vm614, %v1312, %v1314
    %v1316 = vsel %vm614, %v1314, %v1312
    %v1317 = vmul.f32 %v1315, %v621
    %v1318 = vmul.f32 %v1316, %v625
    %1319 = vrot.lane.b32.xlu0 %v1085, 112
    %v1320 = vpop.permute.xlu0 %1319
    %1321 = vrot.lane.b32.xlu0 %v1086, 112
    %v1322 = vpop.permute.xlu0 %1321
    %v1323 = vsel %vm634, %v1320, %v1322
    %v1324 = vsel %vm634, %v1322, %v1320
    %v1325 = vmul.f32 %v1323, %v641
    %v1326 = vmul.f32 %v1324, %v645
    %1327 = vrot.lane.b32.xlu0 %v1085, 111
    %v1328 = vpop.permute.xlu0 %1327
    %1329 = vrot.lane.b32.xlu0 %v1086, 111
    %v1330 = vpop.permute.xlu0 %1329
    %v1331 = vsel %vm654, %v1328, %v1330
    %v1332 = vsel %vm654, %v1330, %v1328
    %v1333 = vmul.f32 %v1331, %v661
    %v1334 = vmul.f32 %v1332, %v665
    %1335 = vrot.lane.b32.xlu0 %v1269, 17
    %v1336 = vpop.permute.xlu0 %1335
    %1337 = vrot.lane.b32.xlu0 %v1270, 17
    %v1338 = vpop.permute.xlu0 %1337
    %v1339 = vsel %vm514, %v1336, %v1338
    %v1340 = vsel %vm514, %v1338, %v1336
    %v1341 = vmul.f32 %v1340, %v521
    %v1342 = vmul.f32 %v1339, %v525
    %1343 = vrot.lane.b32.xlu0 %v1269, 16
    %v1344 = vpop.permute.xlu0 %1343
    %1345 = vrot.lane.b32.xlu0 %v1270, 16
    %v1346 = vpop.permute.xlu0 %1345
    %v1347 = vsel %vm534, %v1344, %v1346
    %v1348 = vsel %vm534, %v1346, %v1344
    %v1349 = vmul.f32 %v1348, %v541
    %v1350 = vmul.f32 %v1347, %v545
    %1351 = vrot.lane.b32.xlu0 %v1269, 15
    %v1352 = vpop.permute.xlu0 %1351
    %1353 = vrot.lane.b32.xlu0 %v1270, 15
    %v1354 = vpop.permute.xlu0 %1353
    %v1355 = vsel %vm554, %v1352, %v1354
    %v1356 = vsel %vm554, %v1354, %v1352
    %v1357 = vmul.f32 %v1356, %v561
    %v1358 = vmul.f32 %v1355, %v565
    %1359 = vrot.lane.b32.xlu0 %v1269, 1
    %v1360 = vpop.permute.xlu0 %1359
    %1361 = vrot.lane.b32.xlu0 %v1270, 1
    %v1362 = vpop.permute.xlu0 %1361
    %v1363 = vsel %vm574, %v1360, %v1362
    %v1364 = vsel %vm574, %v1362, %v1360
    %v1365 = vmul.f32 %v1364, %v581
    %v1366 = vmul.f32 %v1363, %v585
    %1367 = vrot.lane.b32.xlu0 %v1269, 127
    %v1368 = vpop.permute.xlu0 %1367
    %1369 = vrot.lane.b32.xlu0 %v1270, 127
    %v1370 = vpop.permute.xlu0 %1369
    %v1371 = vsel %vm594, %v1368, %v1370
    %v1372 = vsel %vm594, %v1370, %v1368
    %v1373 = vmul.f32 %v1371, %v601
    %v1374 = vmul.f32 %v1372, %v605
    %1375 = vrot.lane.b32.xlu0 %v1269, 113
    %v1376 = vpop.permute.xlu0 %1375
    %1377 = vrot.lane.b32.xlu0 %v1270, 113
    %v1378 = vpop.permute.xlu0 %1377
    %v1379 = vsel %vm614, %v1376, %v1378
    %v1380 = vsel %vm614, %v1378, %v1376
    %v1381 = vmul.f32 %v1379, %v621
    %v1382 = vmul.f32 %v1380, %v625
    %1383 = vrot.lane.b32.xlu0 %v1269, 112
    %v1384 = vpop.permute.xlu0 %1383
    %1385 = vrot.lane.b32.xlu0 %v1270, 112
    %v1386 = vpop.permute.xlu0 %1385
    %v1387 = vsel %vm634, %v1384, %v1386
    %v1388 = vsel %vm634, %v1386, %v1384
    %v1389 = vmul.f32 %v1387, %v641
    %v1390 = vmul.f32 %v1388, %v645
    %1391 = vrot.lane.b32.xlu0 %v1269, 111
    %v1392 = vpop.permute.xlu0 %1391
    %1393 = vrot.lane.b32.xlu0 %v1270, 111
    %v1394 = vpop.permute.xlu0 %1393
    %v1395 = vsel %vm654, %v1392, %v1394
    %v1396 = vsel %vm654, %v1394, %v1392
    %v1397 = vmul.f32 %v1395, %v661
    %v1398 = vmul.f32 %v1396, %v665
    %v1399 = vld [vmem:[#allocation11] sm:$0xf]
    %v1400 = vpack.c.bf16 %v1285, %v1277
    %v1401 = vpack.c.bf16 %v1286, %v1278
    %v1402 = vpack.c.bf16 %v1349, %v1341
    %v1403 = vpack.c.bf16 %v1350, %v1342
    %v1404 = vpack.c.bf16 %v1301, %v1293
    %v1405 = vpack.c.bf16 %v1302, %v1294
    %v1406 = vpack.c.bf16 %v1365, %v1357
    %v1407 = vpack.c.bf16 %v1366, %v1358
    %v1408 = vpack.c.bf16 %v1309, %v1085
    %v1409 = vpack.c.bf16 %v1310, %v1086
    %v1410 = vpack.c.bf16 %v1373, %v1269
    %v1411 = vpack.c.bf16 %v1374, %v1270
    %v1412 = vpack.c.bf16 %v1325, %v1317
    %v1413 = vpack.c.bf16 %v1326, %v1318
    %v1414 = vpack.c.bf16 %v1389, %v1381
    %v1415 = vpack.c.bf16 %v1390, %v1382
    %v1416 = vpack.c.bf16 %v1333, %v1333
    %v1417 = vpack.c.bf16 %v1334, %v1334
    %v1418 = vpack.c.bf16 %v1397, %v1397
    %v1419 = vpack.c.bf16 %v1398, %v1398
    %v1421 = vsel %vm755, %v1399, 0
    %v1424 = vsel %vm759, %v1416, 0
    %v1427 = vsel %vm759, %v1417, 0
    %v1430 = vsel %vm759, %v1418, 0
    %v1433 = vsel %vm759, %v1419, 0
    %1435 = vmatprep.subr.bf16.mxu0 0
    %1436 = vmatpush1.bf16.msra.mxu0 0
    %1437 = vmatprep.subr.bf16.mxu0 0
    %1438 = vmatpush1.bf16.msra.mxu0 0
    %1439 = vmatprep.subr.bf16.mxu0 0
    %1440 = vmatpush1.bf16.msra.mxu0 0
    %1441 = vmatprep.subr.bf16.mxu0 %v1427
    %1442 = vmatpush1.bf16.msra.mxu0 %v1424
    %1443 = vmatprep.subr.bf16.mxu0 %v1413
    %1444 = vmatpush1.bf16.msra.mxu0 %v1412
    %1445 = vmatprep.subr.bf16.mxu0 %v1409
    %1446 = vmatpush1.bf16.msra.mxu0 %v1408
    %1447 = vmatprep.subr.bf16.mxu0 %v1405
    %1448 = vmatpush1.bf16.msra.mxu0 %v1404
    %1449 = vmatprep.subr.bf16.mxu0 %v1401
    %1450 = vmatpush1.bf16.msra.mxu0 %v1400
    %1451 = vmatprep.subr.bf16.mxu0 0
    %1452 = vmatpush2.bf16.msra.mxu0 0
    %1453 = vmatprep.subr.bf16.mxu0 0
    %1454 = vmatpush2.bf16.msra.mxu0 0
    %1455 = vmatprep.subr.bf16.mxu0 0
    %1456 = vmatpush2.bf16.msra.mxu0 0
    %1457 = vmatprep.subr.bf16.mxu0 0
    %1458 = vmatpush2.bf16.msra.mxu0 0
    %1459 = vmatprep.subr.bf16.mxu0 0
    %1460 = vmatpush2.bf16.msra.mxu0 0
    %1461 = vmatprep.subr.bf16.mxu0 0
    %1462 = vmatpush2.bf16.msra.mxu0 0
    %1463 = vmatprep.subr.bf16.mxu0 0
    %1464 = vmatpush2.bf16.msra.mxu0 0
    %1465 = vmatprep.subr.bf16.mxu0 0
    %1466 = vmatpush2.bf16.msra.mxu0 0
    %1467 = vmatprep.mubr.bf16.mxu0 0
    %1468 = vmatmul.mubr.bf16.gmra.mxu0 %v1421
    %v1469 = vpop.f32.mrf.mxu0
    %v1470 = vadd.f32 0.0, %v1469
    %v1471 = vpop.f32.mrf.mxu0
    %v1472 = vadd.f32 0.0, %v1471
    %v1473 = vpop.f32.mrf.mxu0
    %v1474 = vpop.f32.mrf.mxu0
    %1475 = vdwg.mxu0
    %1476 = vmatprep.subr.bf16.mxu0 0
    %1477 = vmatpush1.bf16.msra.mxu0 0
    %1478 = vmatprep.subr.bf16.mxu0 0
    %1479 = vmatpush1.bf16.msra.mxu0 0
    %1480 = vmatprep.subr.bf16.mxu0 0
    %1481 = vmatpush1.bf16.msra.mxu0 0
    %1482 = vmatprep.subr.bf16.mxu0 %v1433
    %1483 = vmatpush1.bf16.msra.mxu0 %v1430
    %1484 = vmatprep.subr.bf16.mxu0 %v1415
    %1485 = vmatpush1.bf16.msra.mxu0 %v1414
    %1486 = vmatprep.subr.bf16.mxu0 %v1411
    %1487 = vmatpush1.bf16.msra.mxu0 %v1410
    %1488 = vmatprep.subr.bf16.mxu0 %v1407
    %1489 = vmatpush1.bf16.msra.mxu0 %v1406
    %1490 = vmatprep.subr.bf16.mxu0 %v1403
    %1491 = vmatpush1.bf16.msra.mxu0 %v1402
    %1492 = vmatprep.subr.bf16.mxu0 0
    %1493 = vmatpush2.bf16.msra.mxu0 0
    %1494 = vmatprep.subr.bf16.mxu0 0
    %1495 = vmatpush2.bf16.msra.mxu0 0
    %1496 = vmatprep.subr.bf16.mxu0 0
    %1497 = vmatpush2.bf16.msra.mxu0 0
    %1498 = vmatprep.subr.bf16.mxu0 0
    %1499 = vmatpush2.bf16.msra.mxu0 0
    %1500 = vmatprep.subr.bf16.mxu0 0
    %1501 = vmatpush2.bf16.msra.mxu0 0
    %1502 = vmatprep.subr.bf16.mxu0 0
    %1503 = vmatpush2.bf16.msra.mxu0 0
    %1504 = vmatprep.subr.bf16.mxu0 0
    %1505 = vmatpush2.bf16.msra.mxu0 0
    %1506 = vmatprep.subr.bf16.mxu0 0
    %1507 = vmatpush2.bf16.msra.mxu0 0
    %1508 = vmatprep.mubr.bf16.mxu0 0
    %1509 = vmatmul.mubr.bf16.gmra.mxu0 %v1421
    %v1510 = vpop.f32.mrf.mxu0
    %v1511 = vadd.f32 0.0, %v1510
    %v1512 = vpop.f32.mrf.mxu0
    %v1513 = vadd.f32 0.0, %v1512
    %v1514 = vpop.f32.mrf.mxu0
    %v1515 = vpop.f32.mrf.mxu0
    %1516 = vdwg.mxu0
    %1517 = vset.pattern.permute.xlu0 5
    %1518 = vperm.xlu0 %1517, %v117
    %v1519 = vpop.permute.xlu0 %1518
    %v1521 = vadd.f32 %v1470, %v1519
    %v1522 = vadd.f32 %v1472, %v1519
    %v1523 = vadd.f32 %v1511, %v1519
    %v1524 = vadd.f32 %v1513, %v1519
    %v1525 = vld [vmem:[#allocation13] sm:$0xf]
    %v1526 = vpack.c.bf16 %v133, %v133
    %v1527 = vpack.c.bf16 %v134, %v134
    %v1528 = vpack.c.bf16 %v136, %v136
    %v1529 = vpack.c.bf16 %v137, %v137
    %v1531 = vsel %vm142, %v1525, 0
    %v1534 = vsel %vm759, %v1526, 0
    %v1537 = vsel %vm759, %v1527, 0
    %v1540 = vsel %vm759, %v1528, 0
    %v1543 = vsel %vm759, %v1529, 0
    %1545 = vmatprep.subr.bf16.mxu0 0
    %1546 = vmatpush1.bf16.msra.mxu0 0
    %1547 = vmatprep.subr.bf16.mxu0 0
    %1548 = vmatpush1.bf16.msra.mxu0 0
    %1549 = vmatprep.subr.bf16.mxu0 0
    %1550 = vmatpush1.bf16.msra.mxu0 0
    %1551 = vmatprep.subr.bf16.mxu0 0
    %1552 = vmatpush1.bf16.msra.mxu0 0
    %1553 = vmatprep.subr.bf16.mxu0 0
    %1554 = vmatpush1.bf16.msra.mxu0 0
    %1555 = vmatprep.subr.bf16.mxu0 0
    %1556 = vmatpush1.bf16.msra.mxu0 0
    %1557 = vmatprep.subr.bf16.mxu0 0
    %1558 = vmatpush1.bf16.msra.mxu0 0
    %1559 = vmatprep.subr.bf16.mxu0 %v1537
    %1560 = vmatpush1.bf16.msra.mxu0 %v1534
    %1561 = vmatprep.subr.bf16.mxu0 0
    %1562 = vmatpush2.bf16.msra.mxu0 0
    %1563 = vmatprep.subr.bf16.mxu0 0
    %1564 = vmatpush2.bf16.msra.mxu0 0
    %1565 = vmatprep.subr.bf16.mxu0 0
    %1566 = vmatpush2.bf16.msra.mxu0 0
    %1567 = vmatprep.subr.bf16.mxu0 0
    %1568 = vmatpush2.bf16.msra.mxu0 0
    %1569 = vmatprep.subr.bf16.mxu0 0
    %1570 = vmatpush2.bf16.msra.mxu0 0
    %1571 = vmatprep.subr.bf16.mxu0 0
    %1572 = vmatpush2.bf16.msra.mxu0 0
    %1573 = vmatprep.subr.bf16.mxu0 0
    %1574 = vmatpush2.bf16.msra.mxu0 0
    %1575 = vmatprep.subr.bf16.mxu0 0
    %1576 = vmatpush2.bf16.msra.mxu0 0
    %1577 = vmatprep.mubr.bf16.mxu0 0
    %1578 = vmatmul.mubr.bf16.gmra.mxu0 %v1531
    %v1579 = vpop.f32.mrf.mxu0
    %v1580 = vadd.f32 0.0, %v1579
    %v1581 = vpop.f32.mrf.mxu0
    %v1582 = vadd.f32 0.0, %v1581
    %v1583 = vpop.f32.mrf.mxu0
    %v1584 = vpop.f32.mrf.mxu0
    %1585 = vdwg.mxu0
    %1586 = vmatprep.subr.bf16.mxu0 0
    %1587 = vmatpush1.bf16.msra.mxu0 0
    %1588 = vmatprep.subr.bf16.mxu0 0
    %1589 = vmatpush1.bf16.msra.mxu0 0
    %1590 = vmatprep.subr.bf16.mxu0 0
    %1591 = vmatpush1.bf16.msra.mxu0 0
    %1592 = vmatprep.subr.bf16.mxu0 0
    %1593 = vmatpush1.bf16.msra.mxu0 0
    %1594 = vmatprep.subr.bf16.mxu0 0
    %1595 = vmatpush1.bf16.msra.mxu0 0
    %1596 = vmatprep.subr.bf16.mxu0 0
    %1597 = vmatpush1.bf16.msra.mxu0 0
    %1598 = vmatprep.subr.bf16.mxu0 0
    %1599 = vmatpush1.bf16.msra.mxu0 0
    %1600 = vmatprep.subr.bf16.mxu0 %v1543
    %1601 = vmatpush1.bf16.msra.mxu0 %v1540
    %1602 = vmatprep.subr.bf16.mxu0 0
    %1603 = vmatpush2.bf16.msra.mxu0 0
    %1604 = vmatprep.subr.bf16.mxu0 0
    %1605 = vmatpush2.bf16.msra.mxu0 0
    %1606 = vmatprep.subr.bf16.mxu0 0
    %1607 = vmatpush2.bf16.msra.mxu0 0
    %1608 = vmatprep.subr.bf16.mxu0 0
    %1609 = vmatpush2.bf16.msra.mxu0 0
    %1610 = vmatprep.subr.bf16.mxu0 0
    %1611 = vmatpush2.bf16.msra.mxu0 0
    %1612 = vmatprep.subr.bf16.mxu0 0
    %1613 = vmatpush2.bf16.msra.mxu0 0
    %1614 = vmatprep.subr.bf16.mxu0 0
    %1615 = vmatpush2.bf16.msra.mxu0 0
    %1616 = vmatprep.subr.bf16.mxu0 0
    %1617 = vmatpush2.bf16.msra.mxu0 0
    %1618 = vmatprep.mubr.bf16.mxu0 0
    %1619 = vmatmul.mubr.bf16.gmra.mxu0 %v1531
    %v1620 = vpop.f32.mrf.mxu0
    %v1621 = vadd.f32 0.0, %v1620
    %v1622 = vpop.f32.mrf.mxu0
    %v1623 = vadd.f32 0.0, %v1622
    %v1624 = vpop.f32.mrf.mxu0
    %v1625 = vpop.f32.mrf.mxu0
    %1626 = vdwg.mxu0
    %1627 = vset.pattern.permute.xlu0 6
    %1628 = vperm.xlu0 %1627, %v117
    %v1629 = vpop.permute.xlu0 %1628
    %v1631 = vadd.f32 %v1580, %v1629
    %v1632 = vadd.f32 %v1582, %v1629
    %v1633 = vadd.f32 %v1621, %v1629
    %v1634 = vadd.f32 %v1623, %v1629
    %v1635 = vadd.f32 %v1521, %v1631
    %v1636 = vadd.f32 %v1522, %v1632
    %1637 = vst [vmem:[#allocation14] sm:$0xff] %v1635
    %1638 = vst [vmem:[#allocation14 + $0x8] sm:$0xff] %v1636
    %v1639 = vadd.f32 %v1523, %v1633
    %v1640 = vadd.f32 %v1524, %v1634
    %s1641 = scalar_lea.vmem [#allocation14], 16
    %1642 = vst [vmem:[%s1641] sm:$0xff] %v1639
    %1643 = vst [vmem:[%s1641 + $0x8] sm:$0xff] %v1640
    // Predicated region
    $region66: #{tpu_custom_call.1} parent=1 // pred_check
      _
    $region67: #{tpu_custom_call.1} parent=1 // pred_check_branch
      %1645 = sbr.rel (0) target = $region69
    $region68: #{tpu_custom_call.1} parent=1 // pred_region
      %s1647 = ssub.s32 512, 512
      %1648 = vsyncadd [#allocation4], %s1647
      %s1649 = sshll.u32 [#allocation14], 4
      %s1650 = int_to_ptr.vmem [resolvable:$true] %s1649
      %1655 = dma.vmem_to_hbm [thread:$0]  %s1650, 512, %s9, [#allocation4], 256, 256, 16
    $region69: #{tpu_custom_call.1} parent=1 // pred_fallthru
      _
    // Predicated region
    $region70: #{tpu_custom_call.1} parent=1 // pred_check
      _
    $region71: #{tpu_custom_call.1} parent=1 // pred_check_branch
      %1657 = sbr.rel (0) target = $region73
    $region72: #{tpu_custom_call.1} parent=1 // pred_region
      %1658 = dma.done [#allocation4], 512
    $region73: #{tpu_custom_call.1} parent=1 // pred_fallthru
      _
    %1659 = vsyncpa [#allocation3], 1
    %1660 = vsyncpa [#allocation6], 1
    %1661 = vsyncpa [#allocation9], 1
    %1662 = vsyncpa [#allocation12], 1
    %1663 = vsyncpa [#allocation4], 1

</llo_original>
